<compile_context>
chip_gen: v7x
topology: tpu7x:2x2x1
jax: 0.10.0
libtpu: 0.0.40
codegen_flags: <defaults>
</compile_context>

<pallas_src>
import functools
import numpy as np

import jax
import jax.numpy as jnp
from jax.experimental import pallas as pl
from jax.experimental.pallas import tpu as pltpu


# --------------------------------------------------------------------------
# helpers
# --------------------------------------------------------------------------
def _gelu_exact(x):
    # F.gelu default (exact / erf form)
    return 0.5 * x * (1.0 + jax.lax.erf(x * (1.0 / np.sqrt(2.0))))


def quaternion_conv_weight(key, in_ch, out_ch, ksize, std=0.02):
    """Dense (out_ch, in_ch, k, k) weight of a QuaternionConv whose r/i/j/k
    components are ~ N(0, std^2), as in torch.nn.init.normal_(std=0.02)."""
    o4, i4 = out_ch // 4, in_ch // 4
    kr, ki, kj, kk = jax.random.split(key, 4)
    shape = (o4, i4, ksize, ksize)
    r = std * jax.random.normal(kr, shape, jnp.float32)
    i = std * jax.random.normal(ki, shape, jnp.float32)
    j = std * jax.random.normal(kj, shape, jnp.float32)
    k = std * jax.random.normal(kk, shape, jnp.float32)
    row_r = jnp.concatenate([r, -i, -j, -k], axis=1)
    row_i = jnp.concatenate([i,  r, -k,  j], axis=1)
    row_j = jnp.concatenate([j,  k,  r, -i], axis=1)
    row_k = jnp.concatenate([k, -j,  i,  r], axis=1)
    return jnp.concatenate([row_r, row_i, row_j, row_k], axis=0)  # (O, I, k, k)


def _tap_masks(H, W):
    """(9, 1, H*W) f32 validity masks for the 9 taps of a SAME-padded 3x3 conv,
    enumerated (dy, dx) in row-major order over {-1,0,1}^2."""
    ys, xs = np.meshgrid(np.arange(H), np.arange(W), indexing="ij")
    masks = []
    for dy in (-1, 0, 1):
        for dx in (-1, 0, 1):
            valid = ((ys + dy >= 0) & (ys + dy < H) &
                     (xs + dx >= 0) & (xs + dx < W))
            masks.append(valid.reshape(-1).astype(np.float32))
    return jnp.asarray(np.stack(masks)).reshape(9, 1, H * W)


# --------------------------------------------------------------------------
# fused Pallas kernel: project_in -> 3x3 quat conv + gated GELU -> project_out
# --------------------------------------------------------------------------
def _qff_fused_kernel(x_ref, w_in_ref, w_dw_ref, w_out_ref,
                      b_in_ref, b_dw_ref, b_out_ref, mask_ref, o_ref,
                      *, W, P, hf):
    x = x_ref[0]                                              # (Cin, P) bf16

    # ---- project_in: 1x1 quaternion conv, channels on sublanes, pixels on lanes
    h = jnp.dot(w_in_ref[...], x, preferred_element_type=jnp.float32)
    h = h + b_in_ref[...]                                     # (C2, P) f32

    # ---- 3x3 quaternion conv (SAME padding) as 9 rolled + masked taps
    acc = jnp.zeros_like(h)                                   # (C2, P) f32
    t = 0
    for dy in (-1, 0, 1):
        for dx in (-1, 0, 1):
            s = dy * W + dx                                   # flat pixel shift
            if s == 0:
                shifted = h
            else:
                # out[p] must read h[p + s]  ->  roll by -s (jnp.roll convention)
                shifted = pltpu.roll(h, shift=(-s) % P, axis=1)
            tap = (shifted * mask_ref[t]).astype(jnp.bfloat16)
            acc = acc + jnp.dot(w_dw_ref[t], tap,
                                preferred_element_type=jnp.float32)
            t += 1
    acc = acc + b_dw_ref[...]                                 # (C2, P) f32

    # ---- chunk along channels + gated GELU (kept in f32 on the VPU/EUP)
    x1 = acc[:hf, :]
    x2 = acc[hf:, :]
    g = (_gelu_exact(x1) * x2).astype(jnp.bfloat16)           # (hf, P)

    # ---- project_out: 1x1 quaternion conv; lane-dense (dim, P) store
    y = jnp.dot(w_out_ref[...], g, preferred_element_type=jnp.float32)
    o_ref[0] = (y + b_out_ref[...]).astype(o_ref.dtype)


# --------------------------------------------------------------------------
# QFeedForward forward pass (wrapper)
# --------------------------------------------------------------------------
def qfeedforward(x_nchw, params):
    N, Cin, H, W = x_nchw.shape
    P = H * W

    w_in = params["w_in"][:, :, 0, 0]                         # (C2, Cin)
    C2 = w_in.shape[0]
    hf = C2 // 2
    w_dw = params["w_dw"]                                     # (C2, C2, 3, 3)
    w_dw_taps = jnp.transpose(w_dw, (2, 3, 0, 1)).reshape(9, C2, C2)
    w_out = params["w_out"][:, :, 0, 0]                       # (dim, hf)
    dim = w_out.shape[0]

    # bf16 operands for the MXU (accumulation stays f32 inside the kernel)
    x3 = x_nchw.reshape(N, Cin, P).astype(jnp.bfloat16)       # NCHW, no transpose
    w_in_b = w_in.astype(jnp.bfloat16)
    w_dw_b = w_dw_taps.astype(jnp.bfloat16)
    w_out_b = w_out.astype(jnp.bfloat16)
    b_in = params["b_in"].reshape(C2, 1).astype(jnp.float32)
    b_dw = params["b_dw"].reshape(C2, 1).astype(jnp.float32)
    b_out = params["b_out"].reshape(dim, 1).astype(jnp.float32)
    masks = _tap_masks(H, W)                                  # (9, 1, P) f32

    kern = functools.partial(_qff_fused_kernel, W=W, P=P, hf=hf)
    y3 = pl.pallas_call(
        kern,
        out_shape=jax.ShapeDtypeStruct((N, dim, P), jnp.float32),
        grid=(N,),
        in_specs=[
            pl.BlockSpec((1, Cin, P), lambda n: (n, 0, 0)),   # activations
            pl.BlockSpec((C2, Cin), lambda n: (0, 0)),        # w_in   (resident)
            pl.BlockSpec((9, C2, C2), lambda n: (0, 0, 0)),   # w_dw taps
            pl.BlockSpec((dim, hf), lambda n: (0, 0)),        # w_out
            pl.BlockSpec((C2, 1), lambda n: (0, 0)),          # b_in
            pl.BlockSpec((C2, 1), lambda n: (0, 0)),          # b_dw
            pl.BlockSpec((dim, 1), lambda n: (0, 0)),         # b_out
            pl.BlockSpec((9, 1, P), lambda n: (0, 0, 0)),     # 3x3 border masks
        ],
        out_specs=pl.BlockSpec((1, dim, P), lambda n: (n, 0, 0)),
        compiler_params=pltpu.CompilerParams(
            dimension_semantics=("parallel",)),
    )(x3, w_in_b, w_dw_b, w_out_b, b_in, b_dw, b_out, masks)

    return y3.reshape(N, dim, H, W)                           # NCHW out


# --------------------------------------------------------------------------
# pure-JAX reference (for sanity check)
# --------------------------------------------------------------------------
def reference(x_nchw, params):
    x = jnp.transpose(x_nchw, (0, 2, 3, 1))
    dn = ("NHWC", "HWIO", "NHWC")

    def conv(inp, w_oihw, b, pad):
        w = jnp.transpose(w_oihw, (2, 3, 1, 0))
        y = jax.lax.conv_general_dilated(inp, w, (1, 1), pad,
                                         dimension_numbers=dn,
                                         precision=jax.lax.Precision.HIGHEST)
        return y + b.reshape(1, 1, 1, -1)

    h = conv(x, params["w_in"], params["b_in"], "VALID")
    h = conv(h, params["w_dw"], params["b_dw"], "SAME")
    hf = h.shape[-1] // 2
    g = _gelu_exact(h[..., :hf]) * h[..., hf:]
    y = conv(g, params["w_out"], params["b_out"], "VALID")
    return jnp.transpose(y, (0, 3, 1, 2))


# --------------------------------------------------------------------------
if __name__ == "__main__":
    key = jax.random.PRNGKey(0)
    dim, ffn_expansion_factor = 8, 2
    hf = int(dim * ffn_expansion_factor)   # hidden_features = 16
    C2 = 2 * hf                            # 32
    N, H, W = 2, 16, 16

    k_x, k1, k2, k3 = jax.random.split(key, 4)
    x = jax.random.normal(k_x, (N, dim, H, W), jnp.float32)

    params = {
        "w_in":  quaternion_conv_weight(k1, dim, C2, 1),
        "b_in":  jnp.zeros((C2,), jnp.float32),   # QuaternionConv bias init = 0
        "w_dw":  quaternion_conv_weight(k2, C2, C2, 3),
        "b_dw":  jnp.zeros((C2,), jnp.float32),
        "w_out": quaternion_conv_weight(k3, hf, dim, 1),
        "b_out": jnp.zeros((dim,), jnp.float32),
    }

    y = qfeedforward(x, params)
    jax.block_until_ready(y)

    y_ref = reference(x, params)
    np.testing.assert_allclose(np.asarray(y), np.asarray(y_ref),
                               rtol=5e-2, atol=2e-6)
    print("KERNEL_OK")
</pallas_src>

<mosaic_0001>
module attributes {stable_mosaic.version = 11 : i64} {
  func.func @_qff_fused_kernel(%arg0: i32, %arg1: memref<1x8x256xbf16, #tpu.memory_space<vmem>>, %arg2: memref<32x8xbf16, #tpu.memory_space<vmem>>, %arg3: memref<9x32x32xbf16, #tpu.memory_space<vmem>>, %arg4: memref<8x16xbf16, #tpu.memory_space<vmem>>, %arg5: memref<32x1xf32, #tpu.memory_space<vmem>>, %arg6: memref<32x1xf32, #tpu.memory_space<vmem>>, %arg7: memref<8x1xf32, #tpu.memory_space<vmem>>, %arg8: memref<9x1x256xf32, #tpu.memory_space<vmem>>, %arg9: memref<1x8x256xf32, #tpu.memory_space<vmem>>) attributes {dimension_semantics = [#tpu.dimension_semantics<parallel>], iteration_bounds = array<i64: 2>, scalar_prefetch = 0 : i64, scratch_operands = 0 : i64, tpu.core_type = #tpu.core_type<tc>, window_params = [{transform_indices = @transform_0, window_bounds = array<i64: 1, 8, 256>}, {pipeline_mode = #tpu.pipeline_mode<synchronous>, transform_indices = @transform_1, window_bounds = array<i64: 32, 8>}, {pipeline_mode = #tpu.pipeline_mode<synchronous>, transform_indices = @transform_2, window_bounds = array<i64: 9, 32, 32>}, {pipeline_mode = #tpu.pipeline_mode<synchronous>, transform_indices = @transform_3, window_bounds = array<i64: 8, 16>}, {pipeline_mode = #tpu.pipeline_mode<synchronous>, transform_indices = @transform_4, window_bounds = array<i64: 32, 1>}, {pipeline_mode = #tpu.pipeline_mode<synchronous>, transform_indices = @transform_5, window_bounds = array<i64: 32, 1>}, {pipeline_mode = #tpu.pipeline_mode<synchronous>, transform_indices = @transform_6, window_bounds = array<i64: 8, 1>}, {pipeline_mode = #tpu.pipeline_mode<synchronous>, transform_indices = @transform_7, window_bounds = array<i64: 9, 1, 256>}, {transform_indices = @transform_8, window_bounds = array<i64: 1, 8, 256>}]} {
    %c0 = arith.constant 0 : index
    %c0_0 = arith.constant 0 : index
    %c0_1 = arith.constant 0 : index
    %0 = vector.load %arg1[%c0, %c0_0, %c0_1] : memref<1x8x256xbf16, #tpu.memory_space<vmem>>, vector<1x8x256xbf16>
    %1 = vector.shape_cast %0 : vector<1x8x256xbf16> to vector<8x256xbf16>
    %c0_2 = arith.constant 0 : index
    %c0_3 = arith.constant 0 : index
    %2 = vector.load %arg2[%c0_2, %c0_3] : memref<32x8xbf16, #tpu.memory_space<vmem>>, vector<32x8xbf16>
    %cst = arith.constant dense<0.000000e+00> : vector<32x256xf32>
    %3 = tpu.matmul %2, %1, %cst {dimension_numbers = #tpu.dot_dimension_numbers<[1], [0], [0], [1], [0, 0, 1, 1], [], []>} : vector<32x8xbf16>, vector<8x256xbf16>, vector<32x256xf32> -> vector<32x256xf32>
    %c0_4 = arith.constant 0 : index
    %c0_5 = arith.constant 0 : index
    %4 = vector.load %arg5[%c0_4, %c0_5] : memref<32x1xf32, #tpu.memory_space<vmem>>, vector<32x1xf32>
    %5 = vector.broadcast %4 : vector<32x1xf32> to vector<32x256xf32>
    %6 = arith.addf %3, %5 : vector<32x256xf32>
    %cst_6 = arith.constant 0.000000e+00 : f32
    %7 = vector.broadcast %cst_6 : f32 to vector<32x256xf32>
    %c17_i32 = arith.constant 17 : i32
    %8 = tpu.dynamic_rotate %6 by %c17_i32 dim 1 : vector<32x256xf32>, i32 -> vector<32x256xf32>
    %c0_7 = arith.constant 0 : index
    %c0_8 = arith.constant 0 : index
    %c0_9 = arith.constant 0 : index
    %9 = vector.load %arg8[%c0_7, %c0_8, %c0_9] : memref<9x1x256xf32, #tpu.memory_space<vmem>>, vector<1x1x256xf32>
    %10 = vector.shape_cast %9 : vector<1x1x256xf32> to vector<1x256xf32>
    %11 = vector.broadcast %10 : vector<1x256xf32> to vector<32x256xf32>
    %12 = arith.mulf %8, %11 : vector<32x256xf32>
    %13 = arith.truncf %12 : vector<32x256xf32> to vector<32x256xbf16>
    %c0_10 = arith.constant 0 : index
    %c0_11 = arith.constant 0 : index
    %c0_12 = arith.constant 0 : index
    %14 = vector.load %arg3[%c0_10, %c0_11, %c0_12] : memref<9x32x32xbf16, #tpu.memory_space<vmem>>, vector<1x32x32xbf16>
    %15 = vector.shape_cast %14 : vector<1x32x32xbf16> to vector<32x32xbf16>
    %cst_13 = arith.constant dense<0.000000e+00> : vector<32x256xf32>
    %16 = tpu.matmul %15, %13, %cst_13 {dimension_numbers = #tpu.dot_dimension_numbers<[1], [0], [0], [1], [0, 0, 1, 1], [], []>} : vector<32x32xbf16>, vector<32x256xbf16>, vector<32x256xf32> -> vector<32x256xf32>
    %17 = arith.addf %7, %16 : vector<32x256xf32>
    %c16_i32 = arith.constant 16 : i32
    %18 = tpu.dynamic_rotate %6 by %c16_i32 dim 1 : vector<32x256xf32>, i32 -> vector<32x256xf32>
    %c1 = arith.constant 1 : index
    %c0_14 = arith.constant 0 : index
    %c0_15 = arith.constant 0 : index
    %19 = vector.load %arg8[%c1, %c0_14, %c0_15] : memref<9x1x256xf32, #tpu.memory_space<vmem>>, vector<1x1x256xf32>
    %20 = vector.shape_cast %19 : vector<1x1x256xf32> to vector<1x256xf32>
    %21 = vector.broadcast %20 : vector<1x256xf32> to vector<32x256xf32>
    %22 = arith.mulf %18, %21 : vector<32x256xf32>
    %23 = arith.truncf %22 : vector<32x256xf32> to vector<32x256xbf16>
    %c1_16 = arith.constant 1 : index
    %c0_17 = arith.constant 0 : index
    %c0_18 = arith.constant 0 : index
    %24 = vector.load %arg3[%c1_16, %c0_17, %c0_18] : memref<9x32x32xbf16, #tpu.memory_space<vmem>>, vector<1x32x32xbf16>
    %25 = vector.shape_cast %24 : vector<1x32x32xbf16> to vector<32x32xbf16>
    %cst_19 = arith.constant dense<0.000000e+00> : vector<32x256xf32>
    %26 = tpu.matmul %25, %23, %cst_19 {dimension_numbers = #tpu.dot_dimension_numbers<[1], [0], [0], [1], [0, 0, 1, 1], [], []>} : vector<32x32xbf16>, vector<32x256xbf16>, vector<32x256xf32> -> vector<32x256xf32>
    %27 = arith.addf %17, %26 : vector<32x256xf32>
    %c15_i32 = arith.constant 15 : i32
    %28 = tpu.dynamic_rotate %6 by %c15_i32 dim 1 : vector<32x256xf32>, i32 -> vector<32x256xf32>
    %c2 = arith.constant 2 : index
    %c0_20 = arith.constant 0 : index
    %c0_21 = arith.constant 0 : index
    %29 = vector.load %arg8[%c2, %c0_20, %c0_21] : memref<9x1x256xf32, #tpu.memory_space<vmem>>, vector<1x1x256xf32>
    %30 = vector.shape_cast %29 : vector<1x1x256xf32> to vector<1x256xf32>
    %31 = vector.broadcast %30 : vector<1x256xf32> to vector<32x256xf32>
    %32 = arith.mulf %28, %31 : vector<32x256xf32>
    %33 = arith.truncf %32 : vector<32x256xf32> to vector<32x256xbf16>
    %c2_22 = arith.constant 2 : index
    %c0_23 = arith.constant 0 : index
    %c0_24 = arith.constant 0 : index
    %34 = vector.load %arg3[%c2_22, %c0_23, %c0_24] : memref<9x32x32xbf16, #tpu.memory_space<vmem>>, vector<1x32x32xbf16>
    %35 = vector.shape_cast %34 : vector<1x32x32xbf16> to vector<32x32xbf16>
    %cst_25 = arith.constant dense<0.000000e+00> : vector<32x256xf32>
    %36 = tpu.matmul %35, %33, %cst_25 {dimension_numbers = #tpu.dot_dimension_numbers<[1], [0], [0], [1], [0, 0, 1, 1], [], []>} : vector<32x32xbf16>, vector<32x256xbf16>, vector<32x256xf32> -> vector<32x256xf32>
    %37 = arith.addf %27, %36 : vector<32x256xf32>
    %c1_i32 = arith.constant 1 : i32
    %38 = tpu.dynamic_rotate %6 by %c1_i32 dim 1 : vector<32x256xf32>, i32 -> vector<32x256xf32>
    %c3 = arith.constant 3 : index
    %c0_26 = arith.constant 0 : index
    %c0_27 = arith.constant 0 : index
    %39 = vector.load %arg8[%c3, %c0_26, %c0_27] : memref<9x1x256xf32, #tpu.memory_space<vmem>>, vector<1x1x256xf32>
    %40 = vector.shape_cast %39 : vector<1x1x256xf32> to vector<1x256xf32>
    %41 = vector.broadcast %40 : vector<1x256xf32> to vector<32x256xf32>
    %42 = arith.mulf %38, %41 : vector<32x256xf32>
    %43 = arith.truncf %42 : vector<32x256xf32> to vector<32x256xbf16>
    %c3_28 = arith.constant 3 : index
    %c0_29 = arith.constant 0 : index
    %c0_30 = arith.constant 0 : index
    %44 = vector.load %arg3[%c3_28, %c0_29, %c0_30] : memref<9x32x32xbf16, #tpu.memory_space<vmem>>, vector<1x32x32xbf16>
    %45 = vector.shape_cast %44 : vector<1x32x32xbf16> to vector<32x32xbf16>
    %cst_31 = arith.constant dense<0.000000e+00> : vector<32x256xf32>
    %46 = tpu.matmul %45, %43, %cst_31 {dimension_numbers = #tpu.dot_dimension_numbers<[1], [0], [0], [1], [0, 0, 1, 1], [], []>} : vector<32x32xbf16>, vector<32x256xbf16>, vector<32x256xf32> -> vector<32x256xf32>
    %47 = arith.addf %37, %46 : vector<32x256xf32>
    %c4 = arith.constant 4 : index
    %c0_32 = arith.constant 0 : index
    %c0_33 = arith.constant 0 : index
    %48 = vector.load %arg8[%c4, %c0_32, %c0_33] : memref<9x1x256xf32, #tpu.memory_space<vmem>>, vector<1x1x256xf32>
    %49 = vector.shape_cast %48 : vector<1x1x256xf32> to vector<1x256xf32>
    %50 = vector.broadcast %49 : vector<1x256xf32> to vector<32x256xf32>
    %51 = arith.mulf %6, %50 : vector<32x256xf32>
    %52 = arith.truncf %51 : vector<32x256xf32> to vector<32x256xbf16>
    %c4_34 = arith.constant 4 : index
    %c0_35 = arith.constant 0 : index
    %c0_36 = arith.constant 0 : index
    %53 = vector.load %arg3[%c4_34, %c0_35, %c0_36] : memref<9x32x32xbf16, #tpu.memory_space<vmem>>, vector<1x32x32xbf16>
    %54 = vector.shape_cast %53 : vector<1x32x32xbf16> to vector<32x32xbf16>
    %cst_37 = arith.constant dense<0.000000e+00> : vector<32x256xf32>
    %55 = tpu.matmul %54, %52, %cst_37 {dimension_numbers = #tpu.dot_dimension_numbers<[1], [0], [0], [1], [0, 0, 1, 1], [], []>} : vector<32x32xbf16>, vector<32x256xbf16>, vector<32x256xf32> -> vector<32x256xf32>
    %56 = arith.addf %47, %55 : vector<32x256xf32>
    %c255_i32 = arith.constant 255 : i32
    %57 = tpu.dynamic_rotate %6 by %c255_i32 dim 1 : vector<32x256xf32>, i32 -> vector<32x256xf32>
    %c5 = arith.constant 5 : index
    %c0_38 = arith.constant 0 : index
    %c0_39 = arith.constant 0 : index
    %58 = vector.load %arg8[%c5, %c0_38, %c0_39] : memref<9x1x256xf32, #tpu.memory_space<vmem>>, vector<1x1x256xf32>
    %59 = vector.shape_cast %58 : vector<1x1x256xf32> to vector<1x256xf32>
    %60 = vector.broadcast %59 : vector<1x256xf32> to vector<32x256xf32>
    %61 = arith.mulf %57, %60 : vector<32x256xf32>
    %62 = arith.truncf %61 : vector<32x256xf32> to vector<32x256xbf16>
    %c5_40 = arith.constant 5 : index
    %c0_41 = arith.constant 0 : index
    %c0_42 = arith.constant 0 : index
    %63 = vector.load %arg3[%c5_40, %c0_41, %c0_42] : memref<9x32x32xbf16, #tpu.memory_space<vmem>>, vector<1x32x32xbf16>
    %64 = vector.shape_cast %63 : vector<1x32x32xbf16> to vector<32x32xbf16>
    %cst_43 = arith.constant dense<0.000000e+00> : vector<32x256xf32>
    %65 = tpu.matmul %64, %62, %cst_43 {dimension_numbers = #tpu.dot_dimension_numbers<[1], [0], [0], [1], [0, 0, 1, 1], [], []>} : vector<32x32xbf16>, vector<32x256xbf16>, vector<32x256xf32> -> vector<32x256xf32>
    %66 = arith.addf %56, %65 : vector<32x256xf32>
    %c241_i32 = arith.constant 241 : i32
    %67 = tpu.dynamic_rotate %6 by %c241_i32 dim 1 : vector<32x256xf32>, i32 -> vector<32x256xf32>
    %c6 = arith.constant 6 : index
    %c0_44 = arith.constant 0 : index
    %c0_45 = arith.constant 0 : index
    %68 = vector.load %arg8[%c6, %c0_44, %c0_45] : memref<9x1x256xf32, #tpu.memory_space<vmem>>, vector<1x1x256xf32>
    %69 = vector.shape_cast %68 : vector<1x1x256xf32> to vector<1x256xf32>
    %70 = vector.broadcast %69 : vector<1x256xf32> to vector<32x256xf32>
    %71 = arith.mulf %67, %70 : vector<32x256xf32>
    %72 = arith.truncf %71 : vector<32x256xf32> to vector<32x256xbf16>
    %c6_46 = arith.constant 6 : index
    %c0_47 = arith.constant 0 : index
    %c0_48 = arith.constant 0 : index
    %73 = vector.load %arg3[%c6_46, %c0_47, %c0_48] : memref<9x32x32xbf16, #tpu.memory_space<vmem>>, vector<1x32x32xbf16>
    %74 = vector.shape_cast %73 : vector<1x32x32xbf16> to vector<32x32xbf16>
    %cst_49 = arith.constant dense<0.000000e+00> : vector<32x256xf32>
    %75 = tpu.matmul %74, %72, %cst_49 {dimension_numbers = #tpu.dot_dimension_numbers<[1], [0], [0], [1], [0, 0, 1, 1], [], []>} : vector<32x32xbf16>, vector<32x256xbf16>, vector<32x256xf32> -> vector<32x256xf32>
    %76 = arith.addf %66, %75 : vector<32x256xf32>
    %c240_i32 = arith.constant 240 : i32
    %77 = tpu.dynamic_rotate %6 by %c240_i32 dim 1 : vector<32x256xf32>, i32 -> vector<32x256xf32>
    %c7 = arith.constant 7 : index
    %c0_50 = arith.constant 0 : index
    %c0_51 = arith.constant 0 : index
    %78 = vector.load %arg8[%c7, %c0_50, %c0_51] : memref<9x1x256xf32, #tpu.memory_space<vmem>>, vector<1x1x256xf32>
    %79 = vector.shape_cast %78 : vector<1x1x256xf32> to vector<1x256xf32>
    %80 = vector.broadcast %79 : vector<1x256xf32> to vector<32x256xf32>
    %81 = arith.mulf %77, %80 : vector<32x256xf32>
    %82 = arith.truncf %81 : vector<32x256xf32> to vector<32x256xbf16>
    %c7_52 = arith.constant 7 : index
    %c0_53 = arith.constant 0 : index
    %c0_54 = arith.constant 0 : index
    %83 = vector.load %arg3[%c7_52, %c0_53, %c0_54] : memref<9x32x32xbf16, #tpu.memory_space<vmem>>, vector<1x32x32xbf16>
    %84 = vector.shape_cast %83 : vector<1x32x32xbf16> to vector<32x32xbf16>
    %cst_55 = arith.constant dense<0.000000e+00> : vector<32x256xf32>
    %85 = tpu.matmul %84, %82, %cst_55 {dimension_numbers = #tpu.dot_dimension_numbers<[1], [0], [0], [1], [0, 0, 1, 1], [], []>} : vector<32x32xbf16>, vector<32x256xbf16>, vector<32x256xf32> -> vector<32x256xf32>
    %86 = arith.addf %76, %85 : vector<32x256xf32>
    %c239_i32 = arith.constant 239 : i32
    %87 = tpu.dynamic_rotate %6 by %c239_i32 dim 1 : vector<32x256xf32>, i32 -> vector<32x256xf32>
    %c8 = arith.constant 8 : index
    %c0_56 = arith.constant 0 : index
    %c0_57 = arith.constant 0 : index
    %88 = vector.load %arg8[%c8, %c0_56, %c0_57] : memref<9x1x256xf32, #tpu.memory_space<vmem>>, vector<1x1x256xf32>
    %89 = vector.shape_cast %88 : vector<1x1x256xf32> to vector<1x256xf32>
    %90 = vector.broadcast %89 : vector<1x256xf32> to vector<32x256xf32>
    %91 = arith.mulf %87, %90 : vector<32x256xf32>
    %92 = arith.truncf %91 : vector<32x256xf32> to vector<32x256xbf16>
    %c8_58 = arith.constant 8 : index
    %c0_59 = arith.constant 0 : index
    %c0_60 = arith.constant 0 : index
    %93 = vector.load %arg3[%c8_58, %c0_59, %c0_60] : memref<9x32x32xbf16, #tpu.memory_space<vmem>>, vector<1x32x32xbf16>
    %94 = vector.shape_cast %93 : vector<1x32x32xbf16> to vector<32x32xbf16>
    %cst_61 = arith.constant dense<0.000000e+00> : vector<32x256xf32>
    %95 = tpu.matmul %94, %92, %cst_61 {dimension_numbers = #tpu.dot_dimension_numbers<[1], [0], [0], [1], [0, 0, 1, 1], [], []>} : vector<32x32xbf16>, vector<32x256xbf16>, vector<32x256xf32> -> vector<32x256xf32>
    %96 = arith.addf %86, %95 : vector<32x256xf32>
    %c0_62 = arith.constant 0 : index
    %c0_63 = arith.constant 0 : index
    %97 = vector.load %arg6[%c0_62, %c0_63] : memref<32x1xf32, #tpu.memory_space<vmem>>, vector<32x1xf32>
    %98 = vector.broadcast %97 : vector<32x1xf32> to vector<32x256xf32>
    %99 = arith.addf %96, %98 : vector<32x256xf32>
    %100 = vector.extract_strided_slice %99 {offsets = [0, 0], sizes = [16, 256], strides = [1, 1]} : vector<32x256xf32> to vector<16x256xf32>
    %101 = vector.extract_strided_slice %99 {offsets = [16, 0], sizes = [16, 256], strides = [1, 1]} : vector<32x256xf32> to vector<16x256xf32>
    %cst_64 = arith.constant 5.000000e-01 : f32
    %102 = vector.broadcast %cst_64 : f32 to vector<16x256xf32>
    %103 = arith.mulf %102, %100 : vector<16x256xf32>
    %cst_65 = arith.constant 0.707106769 : f32
    %104 = vector.broadcast %cst_65 : f32 to vector<16x256xf32>
    %105 = arith.mulf %100, %104 : vector<16x256xf32>
    %106 = math.erf %105 : vector<16x256xf32>
    %cst_66 = arith.constant 1.000000e+00 : f32
    %107 = vector.broadcast %cst_66 : f32 to vector<16x256xf32>
    %108 = arith.addf %107, %106 : vector<16x256xf32>
    %109 = arith.mulf %103, %108 : vector<16x256xf32>
    %110 = arith.mulf %109, %101 : vector<16x256xf32>
    %111 = arith.truncf %110 : vector<16x256xf32> to vector<16x256xbf16>
    %c0_67 = arith.constant 0 : index
    %c0_68 = arith.constant 0 : index
    %112 = vector.load %arg4[%c0_67, %c0_68] : memref<8x16xbf16, #tpu.memory_space<vmem>>, vector<8x16xbf16>
    %cst_69 = arith.constant dense<0.000000e+00> : vector<8x256xf32>
    %113 = tpu.matmul %112, %111, %cst_69 {dimension_numbers = #tpu.dot_dimension_numbers<[1], [0], [0], [1], [0, 0, 1, 1], [], []>} : vector<8x16xbf16>, vector<16x256xbf16>, vector<8x256xf32> -> vector<8x256xf32>
    %c0_70 = arith.constant 0 : index
    %c0_71 = arith.constant 0 : index
    %114 = vector.load %arg7[%c0_70, %c0_71] : memref<8x1xf32, #tpu.memory_space<vmem>>, vector<8x1xf32>
    %115 = vector.broadcast %114 : vector<8x1xf32> to vector<8x256xf32>
    %116 = arith.addf %113, %115 : vector<8x256xf32>
    %c0_72 = arith.constant 0 : index
    %c0_73 = arith.constant 0 : index
    %c0_74 = arith.constant 0 : index
    %117 = vector.load %arg9[%c0_72, %c0_73, %c0_74] : memref<1x8x256xf32, #tpu.memory_space<vmem>>, vector<1x8x256xf32>
    %118 = vector.shape_cast %117 : vector<1x8x256xf32> to vector<8x256xf32>
    %119 = vector.shape_cast %116 : vector<8x256xf32> to vector<1x8x256xf32>
    tpu.vector_store %arg9[%c0_72, %c0_73, %c0_74], %119 {strides = array<i32>} : memref<1x8x256xf32, #tpu.memory_space<vmem>>, vector<1x8x256xf32>,
    return
  }
  func.func @transform_0(%arg0: i32) -> (i32, i32, i32) {
    %c0_i32 = arith.constant 0 : i32
    %c0_i32_0 = arith.constant 0 : i32
    %c0_i32_1 = arith.constant 0 : i32
    return %arg0, %c0_i32, %c0_i32_0 : i32, i32, i32
  }
  func.func @transform_1(%arg0: i32) -> (i32, i32) {
    %c0_i32 = arith.constant 0 : i32
    %c0_i32_0 = arith.constant 0 : i32
    %c0_i32_1 = arith.constant 0 : i32
    return %c0_i32, %c0_i32_0 : i32, i32
  }
  func.func @transform_2(%arg0: i32) -> (i32, i32, i32) {
    %c0_i32 = arith.constant 0 : i32
    %c0_i32_0 = arith.constant 0 : i32
    %c0_i32_1 = arith.constant 0 : i32
    %c0_i32_2 = arith.constant 0 : i32
    return %c0_i32, %c0_i32_0, %c0_i32_1 : i32, i32, i32
  }
  func.func @transform_3(%arg0: i32) -> (i32, i32) {
    %c0_i32 = arith.constant 0 : i32
    %c0_i32_0 = arith.constant 0 : i32
    %c0_i32_1 = arith.constant 0 : i32
    return %c0_i32, %c0_i32_0 : i32, i32
  }
  func.func @transform_4(%arg0: i32) -> (i32, i32) {
    %c0_i32 = arith.constant 0 : i32
    %c0_i32_0 = arith.constant 0 : i32
    %c0_i32_1 = arith.constant 0 : i32
    return %c0_i32, %c0_i32_0 : i32, i32
  }
  func.func @transform_5(%arg0: i32) -> (i32, i32) {
    %c0_i32 = arith.constant 0 : i32
    %c0_i32_0 = arith.constant 0 : i32
    %c0_i32_1 = arith.constant 0 : i32
    return %c0_i32, %c0_i32_0 : i32, i32
  }
  func.func @transform_6(%arg0: i32) -> (i32, i32) {
    %c0_i32 = arith.constant 0 : i32
    %c0_i32_0 = arith.constant 0 : i32
    %c0_i32_1 = arith.constant 0 : i32
    return %c0_i32, %c0_i32_0 : i32, i32
  }
  func.func @transform_7(%arg0: i32) -> (i32, i32, i32) {
    %c0_i32 = arith.constant 0 : i32
    %c0_i32_0 = arith.constant 0 : i32
    %c0_i32_1 = arith.constant 0 : i32
    %c0_i32_2 = arith.constant 0 : i32
    return %c0_i32, %c0_i32_0, %c0_i32_1 : i32, i32, i32
  }
  func.func @transform_8(%arg0: i32) -> (i32, i32, i32) {
    %c0_i32 = arith.constant 0 : i32
    %c0_i32_0 = arith.constant 0 : i32
    %c0_i32_1 = arith.constant 0 : i32
    return %arg0, %c0_i32, %c0_i32_0 : i32, i32, i32
  }
}

</mosaic_0001>

<llo_original>
// kernel: tpu_custom_call.1
$region0: #{tpu_custom_call.1}
  #allocation0 [shape = 'u32[]', space=smem, size = 0x4, offset = 0x4, fixed_abs, tag = 'smem constant byte address 0x4 - core index']
  #allocation1 [shape = 'u32[144,128]{1,0:T(1,128)}', space=vmem, size = 0x12000, scoped, tag = 'internal scratch']
  %s0 = inlined_call_operand.vmem [shape: bf16[2,8,256], index: 0, kind: input, shape index: {}]
  %s1 = inlined_call_operand.vmem [shape: bf16[32,8], index: 1, kind: input, shape index: {}]
  %s2 = inlined_call_operand.hbm [shape: bf16[9,32,32], index: 2, kind: input, shape index: {}]
  %s3 = inlined_call_operand.vmem [shape: bf16[8,16], index: 3, kind: input, shape index: {}]
  %s4 = inlined_call_operand.vmem [shape: f32[32,1], index: 4, kind: input, shape index: {}]
  %s5 = inlined_call_operand.vmem [shape: f32[32,1], index: 5, kind: input, shape index: {}]
  %s6 = inlined_call_operand.vmem [shape: f32[8,1], index: 6, kind: input, shape index: {}]
  %s7 = inlined_call_operand.vmem [shape: f32[9,1,256], index: 7, kind: input, shape index: {}]
  %s8 = inlined_call_operand.hbm [shape: f32[2,8,256], index: 8, kind: output, shape index: {}]
  %s9 = sld [smem:[#allocation0]]
  $region69: #{tpu_custom_call.1} parent=0
    _
  %s11 = ssub.s32 1, %s9
  %s12 = scalar_select 0, %s11, %s9
  $region1: #{tpu_custom_call.1} parent=0
    #allocation2 [shape = 'u8[73728]{0}', space=vmem, size = 0x12000, scoped, tag = 'input window, operand 2, single buffered']
    #allocation3 [shape = 's32[2]{0}', space=sflag, size = 0x8, scoped, tag = 'scoped memory for tpu_custom_call.1']
    #allocation4 [shape = 's32[2]{0}', space=sflag, size = 0x8, scoped, tag = 'scoped memory for tpu_custom_call.1']
    #allocation5 [shape = 'u8[16384]{0}', space=vmem, size = 0x4000, scoped, tag = 'output window, operand 0']
    %13 = vsyncpa [#allocation3], 0
    %14 = vsyncpa [#allocation4], 0
    %s15 = scalar_lea.sflag [#allocation4], 1
    %16 = vsyncpa %s15, 0
    loop: start=0, step=1, limit=4
    $region2: #{tpu_custom_call.1} parent=1 // loop_pre_header
      _
    $region3: #{tpu_custom_call.1} parent=1 // loop_header
      %s18 = sphi 0, %s22
      %p19 = scmp.ge.s32.totalorder %s18, 4
      %s28 = sphi 0, %s30
      %s31 = sphi 0, %s28
      %s32 = sphi 0, %s31
      %s48 = sphi 0, %s32
      %s52 = sphi 0, %s52
      %s54 = sphi 0, %s52
      %s55 = sphi 0, %s54
      %s69 = sphi 0, %s55
      %s73 = sphi 0, %s73
      %s75 = sphi 0, %s73
      %s76 = sphi 0, %s75
      %s90 = sphi 0, %s76
      %s94 = sphi 0, %s94
      %s96 = sphi 0, %s94
      %s97 = sphi 0, %s96
      %s111 = sphi 0, %s97
      %s115 = sphi 0, %s115
      %s117 = sphi 0, %s115
      %s118 = sphi 0, %s117
      %s132 = sphi 0, %s118
      %s136 = sphi 0, %s136
      %s138 = sphi 0, %s136
      %s139 = sphi 0, %s138
      %s153 = sphi 0, %s139
      %s157 = sphi 0, %s157
      %s159 = sphi 0, %s157
      %s160 = sphi 0, %s159
      %s174 = sphi 0, %s160
      %s178 = sphi 0, %s178
      %s180 = sphi 0, %s178
      %s181 = sphi 0, %s180
      %s195 = sphi 0, %s181
      %s201 = sphi 0, %s203
      %s204 = sphi 0, %s201
      %s205 = sphi 0, %s204
      %s221 = sphi 0, %s205
    $region4: #{tpu_custom_call.1} parent=1 // loop_header_branch
      %21 = sbr.rel (%p19) target = $region8
    $region5: #{tpu_custom_call.1} parent=1 // loop_body
      %s23 = ssub.s32 %s18, 1
      %s24 = ssub.s32 %s18, 2
      %s25 = sadd.s32 %s18, 1
      %s26 = ssub.s32 %s18, %s25
      %p27 = scmp.eq.s32.totalorder %s26, 0
      %s29 = sadd.s32 %s28, 1
      %s30 = scalar_select %p27, %s28, %s29
      %p33 = pneg %p27
      %p34 = scmp.eq.s32.totalorder %s18, 1
      %p35 = por %p33, %p34
      %p36 = scmp.ne.s32.totalorder %s28, %s31
      %p37 = scmp.eq.s32.totalorder %s18, 0
      %p38 = por %p36, %p37
      %p39 = scmp.ne.s32.totalorder %s28, %s31
      %p40 = scmp.eq.s32.totalorder %s23, 1
      %p41 = por %p39, %p40
      %p42 = scmp.ne.s32.totalorder %s31, %s32
      %p43 = scmp.eq.s32.totalorder %s23, 0
      %p44 = por %p42, %p43
      %p45 = scmp.ne.s32.totalorder %s31, %s32
      %p46 = scmp.eq.s32.totalorder %s24, 1
      %p47 = por %p45, %p46
      %p49 = scmp.ne.s32.totalorder %s32, %s48
      %p50 = scmp.eq.s32.totalorder %s24, 0
      %p51 = por %p49, %p50
      %s53 = sadd.s32 %s52, 1
      %p56 = scmp.eq.s32.totalorder %s18, 1
      %p57 = scmp.ne.s32.totalorder %s52, %s54
      %p58 = scmp.eq.s32.totalorder %s18, 0
      %p59 = por %p57, %p58
      %p60 = scmp.ne.s32.totalorder %s52, %s54
      %p61 = scmp.eq.s32.totalorder %s23, 1
      %p62 = por %p60, %p61
      %p63 = scmp.ne.s32.totalorder %s54, %s55
      %p64 = scmp.eq.s32.totalorder %s23, 0
      %p65 = por %p63, %p64
      %p66 = scmp.ne.s32.totalorder %s54, %s55
      %p67 = scmp.eq.s32.totalorder %s24, 1
      %p68 = por %p66, %p67
      %p70 = scmp.ne.s32.totalorder %s55, %s69
      %p71 = scmp.eq.s32.totalorder %s24, 0
      %p72 = por %p70, %p71
      %s74 = sadd.s32 %s73, 1
      %p77 = scmp.eq.s32.totalorder %s18, 1
      %p78 = scmp.ne.s32.totalorder %s73, %s75
      %p79 = scmp.eq.s32.totalorder %s18, 0
      %p80 = por %p78, %p79
      %p81 = scmp.ne.s32.totalorder %s73, %s75
      %p82 = scmp.eq.s32.totalorder %s23, 1
      %p83 = por %p81, %p82
      %p84 = scmp.ne.s32.totalorder %s75, %s76
      %p85 = scmp.eq.s32.totalorder %s23, 0
      %p86 = por %p84, %p85
      %p87 = scmp.ne.s32.totalorder %s75, %s76
      %p88 = scmp.eq.s32.totalorder %s24, 1
      %p89 = por %p87, %p88
      %p91 = scmp.ne.s32.totalorder %s76, %s90
      %p92 = scmp.eq.s32.totalorder %s24, 0
      %p93 = por %p91, %p92
      %s95 = sadd.s32 %s94, 1
      %p98 = scmp.eq.s32.totalorder %s18, 1
      %p99 = scmp.ne.s32.totalorder %s94, %s96
      %p100 = scmp.eq.s32.totalorder %s18, 0
      %p101 = por %p99, %p100
      %p102 = scmp.ne.s32.totalorder %s94, %s96
      %p103 = scmp.eq.s32.totalorder %s23, 1
      %p104 = por %p102, %p103
      %p105 = scmp.ne.s32.totalorder %s96, %s97
      %p106 = scmp.eq.s32.totalorder %s23, 0
      %p107 = por %p105, %p106
      %p108 = scmp.ne.s32.totalorder %s96, %s97
      %p109 = scmp.eq.s32.totalorder %s24, 1
      %p110 = por %p108, %p109
      %p112 = scmp.ne.s32.totalorder %s97, %s111
      %p113 = scmp.eq.s32.totalorder %s24, 0
      %p114 = por %p112, %p113
      %s116 = sadd.s32 %s115, 1
      %p119 = scmp.eq.s32.totalorder %s18, 1
      %p120 = scmp.ne.s32.totalorder %s115, %s117
      %p121 = scmp.eq.s32.totalorder %s18, 0
      %p122 = por %p120, %p121
      %p123 = scmp.ne.s32.totalorder %s115, %s117
      %p124 = scmp.eq.s32.totalorder %s23, 1
      %p125 = por %p123, %p124
      %p126 = scmp.ne.s32.totalorder %s117, %s118
      %p127 = scmp.eq.s32.totalorder %s23, 0
      %p128 = por %p126, %p127
      %p129 = scmp.ne.s32.totalorder %s117, %s118
      %p130 = scmp.eq.s32.totalorder %s24, 1
      %p131 = por %p129, %p130
      %p133 = scmp.ne.s32.totalorder %s118, %s132
      %p134 = scmp.eq.s32.totalorder %s24, 0
      %p135 = por %p133, %p134
      %s137 = sadd.s32 %s136, 1
      %p140 = scmp.eq.s32.totalorder %s18, 1
      %p141 = scmp.ne.s32.totalorder %s136, %s138
      %p142 = scmp.eq.s32.totalorder %s18, 0
      %p143 = por %p141, %p142
      %p144 = scmp.ne.s32.totalorder %s136, %s138
      %p145 = scmp.eq.s32.totalorder %s23, 1
      %p146 = por %p144, %p145
      %p147 = scmp.ne.s32.totalorder %s138, %s139
      %p148 = scmp.eq.s32.totalorder %s23, 0
      %p149 = por %p147, %p148
      %p150 = scmp.ne.s32.totalorder %s138, %s139
      %p151 = scmp.eq.s32.totalorder %s24, 1
      %p152 = por %p150, %p151
      %p154 = scmp.ne.s32.totalorder %s139, %s153
      %p155 = scmp.eq.s32.totalorder %s24, 0
      %p156 = por %p154, %p155
      %s158 = sadd.s32 %s157, 1
      %p161 = scmp.eq.s32.totalorder %s18, 1
      %p162 = scmp.ne.s32.totalorder %s157, %s159
      %p163 = scmp.eq.s32.totalorder %s18, 0
      %p164 = por %p162, %p163
      %p165 = scmp.ne.s32.totalorder %s157, %s159
      %p166 = scmp.eq.s32.totalorder %s23, 1
      %p167 = por %p165, %p166
      %p168 = scmp.ne.s32.totalorder %s159, %s160
      %p169 = scmp.eq.s32.totalorder %s23, 0
      %p170 = por %p168, %p169
      %p171 = scmp.ne.s32.totalorder %s159, %s160
      %p172 = scmp.eq.s32.totalorder %s24, 1
      %p173 = por %p171, %p172
      %p175 = scmp.ne.s32.totalorder %s160, %s174
      %p176 = scmp.eq.s32.totalorder %s24, 0
      %p177 = por %p175, %p176
      %s179 = sadd.s32 %s178, 1
      %p182 = scmp.eq.s32.totalorder %s18, 1
      %p183 = scmp.ne.s32.totalorder %s178, %s180
      %p184 = scmp.eq.s32.totalorder %s18, 0
      %p185 = por %p183, %p184
      %p186 = scmp.ne.s32.totalorder %s178, %s180
      %p187 = scmp.eq.s32.totalorder %s23, 1
      %p188 = por %p186, %p187
      %p189 = scmp.ne.s32.totalorder %s180, %s181
      %p190 = scmp.eq.s32.totalorder %s23, 0
      %p191 = por %p189, %p190
      %p192 = scmp.ne.s32.totalorder %s180, %s181
      %p193 = scmp.eq.s32.totalorder %s24, 1
      %p194 = por %p192, %p193
      %p196 = scmp.ne.s32.totalorder %s181, %s195
      %p197 = scmp.eq.s32.totalorder %s24, 0
      %p198 = por %p196, %p197
      %s199 = ssub.s32 %s18, %s25
      %p200 = scmp.eq.s32.totalorder %s199, 0
      %s202 = sadd.s32 %s201, 1
      %s203 = scalar_select %p200, %s201, %s202
      %p206 = pneg %p200
      %p207 = scmp.eq.s32.totalorder %s18, 1
      %p208 = por %p206, %p207
      %p209 = scmp.ne.s32.totalorder %s201, %s204
      %p210 = scmp.eq.s32.totalorder %s18, 0
      %p211 = por %p209, %p210
      %p212 = scmp.ne.s32.totalorder %s201, %s204
      %p213 = scmp.eq.s32.totalorder %s23, 1
      %p214 = por %p212, %p213
      %p215 = scmp.ne.s32.totalorder %s204, %s205
      %p216 = scmp.eq.s32.totalorder %s23, 0
      %p217 = por %p215, %p216
      %p218 = scmp.ne.s32.totalorder %s204, %s205
      %p219 = scmp.eq.s32.totalorder %s24, 1
      %p220 = por %p218, %p219
      %p222 = scmp.ne.s32.totalorder %s205, %s221
      %p223 = scmp.eq.s32.totalorder %s24, 0
      %p224 = por %p222, %p223
      %p225 = scmp.le.s32.totalorder 1, %s18
      %p226 = scmp.lt.s32.totalorder %s18, 3
      %p227 = pnand %p225, %p226
      %p228 = pneg %p227
      // Predicated region
      $region9: #{tpu_custom_call.1} parent=5 // pred_check
        _
      $region10: #{tpu_custom_call.1} parent=5 // pred_check_branch
        %230 = sbr.rel (%p227) target = $region12
      $region11: #{tpu_custom_call.1} parent=5 // pred_region
        %s231 = ssub.s32 %s18, 1
        // Predicated region
        $region13: #{tpu_custom_call.1} parent=11 // pred_check
          %p232 = pneg %p65
        $region14: #{tpu_custom_call.1} parent=11 // pred_check_branch
          %234 = sbr.rel (%p232) target = $region16
        $region15: #{tpu_custom_call.1} parent=11 // pred_region
          _
        $region16: #{tpu_custom_call.1} parent=11 // pred_fallthru
          _
        // Predicated region
        $region17: #{tpu_custom_call.1} parent=11 // pred_check
          %p235 = pneg %p86
        $region18: #{tpu_custom_call.1} parent=11 // pred_check_branch
          %237 = sbr.rel (%p235) target = $region20
        $region19: #{tpu_custom_call.1} parent=11 // pred_region
          %s239 = ssub.s32 2304, 2304
          %240 = vsyncadd [#allocation3], %s239
          %s241 = sshll.u32 [#allocation2], 4
          %s242 = int_to_ptr.vmem [resolvable:$true] %s241
          %247 = dma.hbm_to_vmem [thread:$0]  %s2, 2304, %s242, [#allocation3], 64, 64, 4
        $region20: #{tpu_custom_call.1} parent=11 // pred_fallthru
          _
        // Predicated region
        $region21: #{tpu_custom_call.1} parent=11 // pred_check
          %p248 = pneg %p107
        $region22: #{tpu_custom_call.1} parent=11 // pred_check_branch
          %250 = sbr.rel (%p248) target = $region24
        $region23: #{tpu_custom_call.1} parent=11 // pred_region
          _
        $region24: #{tpu_custom_call.1} parent=11 // pred_fallthru
          _
        // Predicated region
        $region25: #{tpu_custom_call.1} parent=11 // pred_check
          %p251 = pneg %p128
        $region26: #{tpu_custom_call.1} parent=11 // pred_check_branch
          %253 = sbr.rel (%p251) target = $region28
        $region27: #{tpu_custom_call.1} parent=11 // pred_region
          _
        $region28: #{tpu_custom_call.1} parent=11 // pred_fallthru
          _
        // Predicated region
        $region29: #{tpu_custom_call.1} parent=11 // pred_check
          %p254 = pneg %p149
        $region30: #{tpu_custom_call.1} parent=11 // pred_check_branch
          %256 = sbr.rel (%p254) target = $region32
        $region31: #{tpu_custom_call.1} parent=11 // pred_region
          _
        $region32: #{tpu_custom_call.1} parent=11 // pred_fallthru
          _
        // Predicated region
        $region33: #{tpu_custom_call.1} parent=11 // pred_check
          %p257 = pneg %p170
        $region34: #{tpu_custom_call.1} parent=11 // pred_check_branch
          %259 = sbr.rel (%p257) target = $region36
        $region35: #{tpu_custom_call.1} parent=11 // pred_region
          _
        $region36: #{tpu_custom_call.1} parent=11 // pred_fallthru
          _
        // Predicated region
        $region37: #{tpu_custom_call.1} parent=11 // pred_check
          %p260 = pneg %p191
        $region38: #{tpu_custom_call.1} parent=11 // pred_check_branch
          %262 = sbr.rel (%p260) target = $region40
        $region39: #{tpu_custom_call.1} parent=11 // pred_region
          _
        $region40: #{tpu_custom_call.1} parent=11 // pred_fallthru
          _
      $region12: #{tpu_custom_call.1} parent=5 // pred_fallthru
        _
      %p263 = scmp.lt.s32.totalorder %s18, 2
      // Predicated region
      $region41: #{tpu_custom_call.1} parent=5 // pred_check
        %p264 = pneg %p263
      $region42: #{tpu_custom_call.1} parent=5 // pred_check_branch
        %266 = sbr.rel (%p264) target = $region44
      $region43: #{tpu_custom_call.1} parent=5 // pred_region
        // Predicated region
        $region45: #{tpu_custom_call.1} parent=43 // pred_check
          %p267 = pneg %p38
        $region46: #{tpu_custom_call.1} parent=43 // pred_check_branch
          %269 = sbr.rel (%p267) target = $region48
        $region47: #{tpu_custom_call.1} parent=43 // pred_region
          %p270 = scmp.lt.s32.totalorder %s18, 1
          %s271 = scalar_select %p270, %s18, 1
          %s272 = smul.addr %s271, 2
          %s273 = smul.addr %s272, 4
          %s274 = scalar_lea.vmem %s0, %s273
        $region48: #{tpu_custom_call.1} parent=43 // pred_fallthru
          _
      $region44: #{tpu_custom_call.1} parent=5 // pred_fallthru
        _
      %p275 = scmp.le.s32.totalorder 1, %s18
      %p276 = scmp.lt.s32.totalorder %s18, 3
      %p277 = pnand %p275, %p276
      %p278 = pneg %p277
      // Predicated region
      $region49: #{tpu_custom_call.1} parent=5 // pred_check
        _
      $region50: #{tpu_custom_call.1} parent=5 // pred_check_branch
        %280 = sbr.rel (%p277) target = $region52
      $region51: #{tpu_custom_call.1} parent=5 // pred_region
        %s281 = ssub.s32 %s18, 1
        // Predicated region
        $region53: #{tpu_custom_call.1} parent=51 // pred_check
          %p282 = pneg %p86
        $region54: #{tpu_custom_call.1} parent=51 // pred_check_branch
          %284 = sbr.rel (%p282) target = $region56
        $region55: #{tpu_custom_call.1} parent=51 // pred_region
          %285 = dma.done [#allocation3], 2304
        $region56: #{tpu_custom_call.1} parent=51 // pred_fallthru
          _
        %p286 = scmp.lt.s32.totalorder %s23, 1
        %s287 = scalar_select %p286, %s23, 1
        %s288 = smul.addr %s287, 2
        %s289 = smul.addr %s288, 4
        %s290 = scalar_lea.vmem %s0, %s289
        %p291 = pneg %p44
        %p292 = pneg %p41
        %p293 = pneg %p65
        %p294 = pneg %p62
        %p295 = pneg %p86
        %p296 = pneg %p83
        %p297 = pneg %p107
        %p298 = pneg %p104
        %p299 = pneg %p128
        %p300 = pneg %p125
        %p301 = pneg %p149
        %p302 = pneg %p146
        %p303 = pneg %p170
        %p304 = pneg %p167
        %p305 = pneg %p191
        %p306 = pneg %p188
        %p307 = pneg %p217
        %p308 = pneg %p214
        %s309 = sand.u32 %s204, 1
        %s310 = scalar_lea.sflag [#allocation4], %s309
        %s311 = sand.u32 %s204, 1
        %s312 = smul.addr %s311, 16
        %s313 = scalar_lea.vmem [#allocation5], %s312
        %p314 = scmp.lt.s32.totalorder %s23, 1
        %s315 = scalar_select %p314, %s23, 1
        %s316 = smul.addr %s315, 2
        %s317 = smul.addr %s316, 4
        %s318 = scalar_lea.vmem %s0, %s317
        %v320 = vld [vmem:[%s318] sm:$0xff]
        %v321 = vld [vmem:[%s1] sm:$0xf]
        %v322 = vld [vmem:[%s1 + $0x4] sm:$0xf]
        %v323 = vld [vmem:[%s1 + $0x8] sm:$0xf]
        %v324 = vld [vmem:[%s1 + $0xc] sm:$0xf]
        %v325 = vld [vmem:[%s4] sm:$0xff]
        %v326 = vld [vmem:[%s4 + $0x8] sm:$0xff]
        %v327 = vld [vmem:[%s4 + $0x10] sm:$0xff]
        %v328 = vld [vmem:[%s4 + $0x18] sm:$0xff]
        %330 = vset.pattern.permute.xlu0 0
        %331 = vperm.xlu0 %330, %v325
        %v332 = vpop.permute.xlu0 %331
        %335 = vset.pattern.permute.xlu0 0
        %336 = vperm.xlu0 %335, %v326
        %v337 = vpop.permute.xlu0 %336
        %340 = vset.pattern.permute.xlu0 0
        %341 = vperm.xlu0 %340, %v327
        %v342 = vpop.permute.xlu0 %341
        %345 = vset.pattern.permute.xlu0 0
        %346 = vperm.xlu0 %345, %v328
        %v347 = vpop.permute.xlu0 %346
        %v353 = vunpack.c.l.b16 %v321
        %v354 = vunpack.c.l.b16 %v322
        %v355 = vunpack.c.l.b16 %v323
        %v356 = vunpack.c.l.b16 %v324
        %v357 = vpack.c.b16 %v354, %v353
        %v358 = vpack.c.b16 %v356, %v355
        %v360 = vunpack.c.l.b16 %v320
        %v361 = vunpack.c.h.b16 %v320
        %v362 = vpack.c.b16 %v360, %v360
        %v363 = vpack.c.b16 %v361, %v361
        %vm364 = vcmask 64512
        %v366 = vsel %vm364, %v357, 0
        %v369 = vsel %vm364, %v358, 0
        %vm371 = vcmask 1043456
        %v373 = vsel %vm371, %v362, 0
        %v376 = vsel %vm371, %v363, 0
        %378 = vmatprep.subr.bf16.mxu0 %v376
        %379 = vmatpush1.bf16.msra.mxu0 %v373
        %380 = vmatprep.subr.bf16.mxu0 0
        %381 = vmatpush1.bf16.msra.mxu0 0
        %382 = vmatprep.subr.bf16.mxu0 0
        %383 = vmatpush1.bf16.msra.mxu0 0
        %384 = vmatprep.subr.bf16.mxu0 0
        %385 = vmatpush1.bf16.msra.mxu0 0
        %386 = vmatprep.subr.bf16.mxu0 0
        %387 = vmatpush1.bf16.msra.mxu0 0
        %388 = vmatprep.subr.bf16.mxu0 0
        %389 = vmatpush1.bf16.msra.mxu0 0
        %390 = vmatprep.subr.bf16.mxu0 0
        %391 = vmatpush1.bf16.msra.mxu0 0
        %392 = vmatprep.subr.bf16.mxu0 0
        %393 = vmatpush1.bf16.msra.mxu0 0
        %394 = vmatprep.subr.bf16.mxu0 0
        %395 = vmatpush1.bf16.msra.mxu0 0
        %396 = vmatprep.subr.bf16.mxu0 0
        %397 = vmatpush1.bf16.msra.mxu0 0
        %398 = vmatprep.subr.bf16.mxu0 0
        %399 = vmatpush1.bf16.msra.mxu0 0
        %400 = vmatprep.subr.bf16.mxu0 0
        %401 = vmatpush1.bf16.msra.mxu0 0
        %402 = vmatprep.subr.bf16.mxu0 0
        %403 = vmatpush1.bf16.msra.mxu0 0
        %404 = vmatprep.subr.bf16.mxu0 0
        %405 = vmatpush1.bf16.msra.mxu0 0
        %406 = vmatprep.subr.bf16.mxu0 0
        %407 = vmatpush1.bf16.msra.mxu0 0
        %408 = vmatprep.subr.bf16.mxu0 0
        %409 = vmatpush1.bf16.msra.mxu0 0
        %410 = vmatprep.mubr.bf16.mxu0 0
        %411 = vmatmul.mubr.bf16.gmra.mrb[0].mxu0 %v366
        %v412 = vpop.f32.mrb[0].mxu0
        %v413 = vadd.f32 %v332, %v412
        %v414 = vpop.f32.mrb[0].mxu0
        %v415 = vadd.f32 %v332, %v414
        %v416 = vpop.f32.mrb[0].mxu0
        %v417 = vadd.f32 %v337, %v416
        %v418 = vpop.f32.mrb[0].mxu0
        %v419 = vadd.f32 %v337, %v418
        %420 = vmatprep.mubr.bf16.mxu0 0
        %421 = vmatmul.mubr.bf16.gmra.mrb[0].mxu0 %v369
        %v422 = vpop.f32.mrb[0].mxu0
        %v423 = vadd.f32 %v342, %v422
        %v424 = vpop.f32.mrb[0].mxu0
        %v425 = vadd.f32 %v342, %v424
        %v426 = vpop.f32.mrb[0].mxu0
        %v427 = vadd.f32 %v347, %v426
        %v428 = vpop.f32.mrb[0].mxu0
        %v429 = vadd.f32 %v347, %v428
        %430 = vdwg.mxu0
        %431 = vrot.lane.b32.xlu0 %v413, 17
        %v432 = vpop.permute.xlu0 %431
        %433 = vrot.lane.b32.xlu0 %v417, 17
        %v434 = vpop.permute.xlu0 %433
        %435 = vrot.lane.b32.xlu0 %v423, 17
        %v436 = vpop.permute.xlu0 %435
        %437 = vrot.lane.b32.xlu0 %v427, 17
        %v438 = vpop.permute.xlu0 %437
        %439 = vrot.lane.b32.xlu0 %v415, 17
        %v440 = vpop.permute.xlu0 %439
        %441 = vrot.lane.b32.xlu0 %v419, 17
        %v442 = vpop.permute.xlu0 %441
        %443 = vrot.lane.b32.xlu0 %v425, 17
        %v444 = vpop.permute.xlu0 %443
        %445 = vrot.lane.b32.xlu0 %v429, 17
        %v446 = vpop.permute.xlu0 %445
        %v447 = vlaneseq
        %v448 = vand.u32 %v447, 127
        %vm449 = vcmp.lt.s32.totalorder %v448, 17
        %v450 = vsel %vm449, %v432, %v440
        %v451 = vsel %vm449, %v434, %v442
        %v452 = vsel %vm449, %v436, %v444
        %v453 = vsel %vm449, %v438, %v446
        %v454 = vsel %vm449, %v440, %v432
        %v455 = vsel %vm449, %v442, %v434
        %v456 = vsel %vm449, %v444, %v436
        %v457 = vsel %vm449, %v446, %v438
        %v458 = vld [vmem:[%s7] sm:$0x3]
        %v460 = vlaneseq
        %v461 = vshrl.u32 %v460, 7
        %v462 = vsub.s32 0, %v461
        %v463 = vrot.slane %v458, %v462
        %v464 = vlaneseq
        %v465 = vshrl.u32 %v464, 7
        %v466 = vsub.s32 1, %v465
        %v467 = vrot.slane %v458, %v466
        %v470 = vmul.f32 %v454, %v463
        %v471 = vmul.f32 %v450, %v467
        %v472 = vmul.f32 %v455, %v463
        %v473 = vmul.f32 %v451, %v467
        %v474 = vmul.f32 %v456, %v463
        %v475 = vmul.f32 %v452, %v467
        %v476 = vmul.f32 %v457, %v463
        %v477 = vmul.f32 %v453, %v467
        %v478 = vpack.c.bf16 %v472, %v470
        %v479 = vpack.c.bf16 %v473, %v471
        %v480 = vpack.c.bf16 %v476, %v474
        %v481 = vpack.c.bf16 %v477, %v475
        %v482 = vld [vmem:[#allocation2] sm:$0xf]
        %v483 = vld [vmem:[#allocation2 + $0x4] sm:$0xf]
        %v484 = vld [vmem:[#allocation2 + $0x8] sm:$0xf]
        %v485 = vld [vmem:[#allocation2 + $0xc] sm:$0xf]
        %486 = vrot.lane.b32.xlu0 %v413, 16
        %v487 = vpop.permute.xlu0 %486
        %488 = vrot.lane.b32.xlu0 %v417, 16
        %v489 = vpop.permute.xlu0 %488
        %490 = vrot.lane.b32.xlu0 %v423, 16
        %v491 = vpop.permute.xlu0 %490
        %492 = vrot.lane.b32.xlu0 %v427, 16
        %v493 = vpop.permute.xlu0 %492
        %494 = vrot.lane.b32.xlu0 %v415, 16
        %v495 = vpop.permute.xlu0 %494
        %496 = vrot.lane.b32.xlu0 %v419, 16
        %v497 = vpop.permute.xlu0 %496
        %498 = vrot.lane.b32.xlu0 %v425, 16
        %v499 = vpop.permute.xlu0 %498
        %500 = vrot.lane.b32.xlu0 %v429, 16
        %v501 = vpop.permute.xlu0 %500
        %vm502 = vcmp.lt.s32.totalorder %v448, 16
        %v503 = vsel %vm502, %v487, %v495
        %v504 = vsel %vm502, %v489, %v497
        %v505 = vsel %vm502, %v491, %v499
        %v506 = vsel %vm502, %v493, %v501
        %v507 = vsel %vm502, %v495, %v487
        %v508 = vsel %vm502, %v497, %v489
        %v509 = vsel %vm502, %v499, %v491
        %v510 = vsel %vm502, %v501, %v493
        %s511 = scalar_lea.vmem %s7, 2
        %v512 = vld [vmem:[%s511] sm:$0x3]
        %v514 = vlaneseq
        %v515 = vshrl.u32 %v514, 7
        %v516 = vsub.s32 0, %v515
        %v517 = vrot.slane %v512, %v516
        %v518 = vlaneseq
        %v519 = vshrl.u32 %v518, 7
        %v520 = vsub.s32 1, %v519
        %v521 = vrot.slane %v512, %v520
        %v524 = vmul.f32 %v507, %v517
        %v525 = vmul.f32 %v503, %v521
        %v526 = vmul.f32 %v508, %v517
        %v527 = vmul.f32 %v504, %v521
        %v528 = vmul.f32 %v509, %v517
        %v529 = vmul.f32 %v505, %v521
        %v530 = vmul.f32 %v510, %v517
        %v531 = vmul.f32 %v506, %v521
        %v532 = vpack.c.bf16 %v526, %v524
        %v533 = vpack.c.bf16 %v527, %v525
        %v534 = vpack.c.bf16 %v530, %v528
        %v535 = vpack.c.bf16 %v531, %v529
        %s536 = scalar_lea.vmem [#allocation2], 16
        %v537 = vld [vmem:[%s536] sm:$0xf]
        %v538 = vld [vmem:[%s536 + $0x4] sm:$0xf]
        %v539 = vld [vmem:[%s536 + $0x8] sm:$0xf]
        %v540 = vld [vmem:[%s536 + $0xc] sm:$0xf]
        %v545 = vunpack.c.l.b16 %v537
        %v546 = vunpack.c.l.b16 %v538
        %v547 = vunpack.c.l.b16 %v539
        %v548 = vunpack.c.l.b16 %v540
        %v549 = vpack.c.b16 %v546, %v545
        %v550 = vpack.c.b16 %v548, %v547
        %vm551 = vcmask 261120
        %v553 = vsel %vm551, %v549, 0
        %v556 = vsel %vm551, %v550, 0
        %558 = vmatprep.subr.bf16.mxu0 %v533
        %559 = vmatpush1.bf16.msra.mxu0 %v532
        %560 = vmatprep.subr.bf16.mxu0 %v535
        %561 = vmatpush1.bf16.msra.mxu0 %v534
        %562 = vmatprep.subr.bf16.mxu0 0
        %563 = vmatpush1.bf16.msra.mxu0 0
        %564 = vmatprep.subr.bf16.mxu0 0
        %565 = vmatpush1.bf16.msra.mxu0 0
        %566 = vmatprep.subr.bf16.mxu0 0
        %567 = vmatpush1.bf16.msra.mxu0 0
        %568 = vmatprep.subr.bf16.mxu0 0
        %569 = vmatpush1.bf16.msra.mxu0 0
        %570 = vmatprep.subr.bf16.mxu0 0
        %571 = vmatpush1.bf16.msra.mxu0 0
        %572 = vmatprep.subr.bf16.mxu0 0
        %573 = vmatpush1.bf16.msra.mxu0 0
        %574 = vmatprep.subr.bf16.mxu0 0
        %575 = vmatpush1.bf16.msra.mxu0 0
        %576 = vmatprep.subr.bf16.mxu0 0
        %577 = vmatpush1.bf16.msra.mxu0 0
        %578 = vmatprep.subr.bf16.mxu0 0
        %579 = vmatpush1.bf16.msra.mxu0 0
        %580 = vmatprep.subr.bf16.mxu0 0
        %581 = vmatpush1.bf16.msra.mxu0 0
        %582 = vmatprep.subr.bf16.mxu0 0
        %583 = vmatpush1.bf16.msra.mxu0 0
        %584 = vmatprep.subr.bf16.mxu0 0
        %585 = vmatpush1.bf16.msra.mxu0 0
        %586 = vmatprep.subr.bf16.mxu0 0
        %587 = vmatpush1.bf16.msra.mxu0 0
        %588 = vmatprep.subr.bf16.mxu0 0
        %589 = vmatpush1.bf16.msra.mxu0 0
        %590 = vmatprep.mubr.bf16.mxu0 0
        %591 = vmatmul.mubr.bf16.gmra.mrb[0].mxu0 %v553
        %v592 = vpop.f32.mrb[0].mxu0
        %v593 = vadd.f32 0.0, %v592
        %v594 = vpop.f32.mrb[0].mxu0
        %v595 = vadd.f32 0.0, %v594
        %v596 = vpop.f32.mrb[0].mxu0
        %v597 = vadd.f32 0.0, %v596
        %v598 = vpop.f32.mrb[0].mxu0
        %v599 = vadd.f32 0.0, %v598
        %600 = vmatprep.mubr.bf16.mxu0 0
        %601 = vmatmul.mubr.bf16.gmra.mrb[0].mxu0 %v556
        %v602 = vpop.f32.mrb[0].mxu0
        %v603 = vadd.f32 0.0, %v602
        %v604 = vpop.f32.mrb[0].mxu0
        %v605 = vadd.f32 0.0, %v604
        %v606 = vpop.f32.mrb[0].mxu0
        %v607 = vadd.f32 0.0, %v606
        %v608 = vpop.f32.mrb[0].mxu0
        %v609 = vadd.f32 0.0, %v608
        %610 = vdwg.mxu0
        %v615 = vunpack.c.l.b16 %v482
        %v616 = vunpack.c.l.b16 %v483
        %v617 = vunpack.c.l.b16 %v484
        %v618 = vunpack.c.l.b16 %v485
        %v619 = vpack.c.b16 %v616, %v615
        %v620 = vpack.c.b16 %v618, %v617
        %v622 = vsel %vm551, %v619, 0
        %v625 = vsel %vm551, %v620, 0
        %627 = vmatprep.subr.bf16.mxu0 %v479
        %628 = vmatpush1.bf16.msra.mxu0 %v478
        %629 = vmatprep.subr.bf16.mxu0 %v481
        %630 = vmatpush1.bf16.msra.mxu0 %v480
        %631 = vmatprep.subr.bf16.mxu0 0
        %632 = vmatpush1.bf16.msra.mxu0 0
        %633 = vmatprep.subr.bf16.mxu0 0
        %634 = vmatpush1.bf16.msra.mxu0 0
        %635 = vmatprep.subr.bf16.mxu0 0
        %636 = vmatpush1.bf16.msra.mxu0 0
        %637 = vmatprep.subr.bf16.mxu0 0
        %638 = vmatpush1.bf16.msra.mxu0 0
        %639 = vmatprep.subr.bf16.mxu0 0
        %640 = vmatpush1.bf16.msra.mxu0 0
        %641 = vmatprep.subr.bf16.mxu0 0
        %642 = vmatpush1.bf16.msra.mxu0 0
        %643 = vmatprep.subr.bf16.mxu0 0
        %644 = vmatpush1.bf16.msra.mxu0 0
        %645 = vmatprep.subr.bf16.mxu0 0
        %646 = vmatpush1.bf16.msra.mxu0 0
        %647 = vmatprep.subr.bf16.mxu0 0
        %648 = vmatpush1.bf16.msra.mxu0 0
        %649 = vmatprep.subr.bf16.mxu0 0
        %650 = vmatpush1.bf16.msra.mxu0 0
        %651 = vmatprep.subr.bf16.mxu0 0
        %652 = vmatpush1.bf16.msra.mxu0 0
        %653 = vmatprep.subr.bf16.mxu0 0
        %654 = vmatpush1.bf16.msra.mxu0 0
        %655 = vmatprep.subr.bf16.mxu0 0
        %656 = vmatpush1.bf16.msra.mxu0 0
        %657 = vmatprep.subr.bf16.mxu0 0
        %658 = vmatpush1.bf16.msra.mxu0 0
        %659 = vmatprep.mubr.bf16.mxu0 0
        %660 = vmatmul.mubr.bf16.gmra.mrb[0].mxu0 %v622
        %v661 = vpop.f32.mrb[0].mxu0
        %v662 = vadd.f32 %v593, %v661
        %v663 = vpop.f32.mrb[0].mxu0
        %v664 = vadd.f32 %v595, %v663
        %v665 = vpop.f32.mrb[0].mxu0
        %v666 = vadd.f32 %v597, %v665
        %v667 = vpop.f32.mrb[0].mxu0
        %v668 = vadd.f32 %v599, %v667
        %669 = vmatprep.mubr.bf16.mxu0 0
        %670 = vmatmul.mubr.bf16.gmra.mrb[0].mxu0 %v625
        %v671 = vpop.f32.mrb[0].mxu0
        %v672 = vadd.f32 %v603, %v671
        %v673 = vpop.f32.mrb[0].mxu0
        %v674 = vadd.f32 %v605, %v673
        %v675 = vpop.f32.mrb[0].mxu0
        %v676 = vadd.f32 %v607, %v675
        %v677 = vpop.f32.mrb[0].mxu0
        %v678 = vadd.f32 %v609, %v677
        %679 = vdwg.mxu0
        %680 = vrot.lane.b32.xlu0 %v413, 15
        %v681 = vpop.permute.xlu0 %680
        %682 = vrot.lane.b32.xlu0 %v417, 15
        %v683 = vpop.permute.xlu0 %682
        %684 = vrot.lane.b32.xlu0 %v423, 15
        %v685 = vpop.permute.xlu0 %684
        %686 = vrot.lane.b32.xlu0 %v427, 15
        %v687 = vpop.permute.xlu0 %686
        %688 = vrot.lane.b32.xlu0 %v415, 15
        %v689 = vpop.permute.xlu0 %688
        %690 = vrot.lane.b32.xlu0 %v419, 15
        %v691 = vpop.permute.xlu0 %690
        %692 = vrot.lane.b32.xlu0 %v425, 15
        %v693 = vpop.permute.xlu0 %692
        %694 = vrot.lane.b32.xlu0 %v429, 15
        %v695 = vpop.permute.xlu0 %694
        %vm696 = vcmp.lt.s32.totalorder %v448, 15
        %v697 = vsel %vm696, %v681, %v689
        %v698 = vsel %vm696, %v683, %v691
        %v699 = vsel %vm696, %v685, %v693
        %v700 = vsel %vm696, %v687, %v695
        %v701 = vsel %vm696, %v689, %v681
        %v702 = vsel %vm696, %v691, %v683
        %v703 = vsel %vm696, %v693, %v685
        %v704 = vsel %vm696, %v695, %v687
        %s705 = scalar_lea.vmem %s7, 4
        %v706 = vld [vmem:[%s705] sm:$0x3]
        %v708 = vlaneseq
        %v709 = vshrl.u32 %v708, 7
        %v710 = vsub.s32 0, %v709
        %v711 = vrot.slane %v706, %v710
        %v712 = vlaneseq
        %v713 = vshrl.u32 %v712, 7
        %v714 = vsub.s32 1, %v713
        %v715 = vrot.slane %v706, %v714
        %v718 = vmul.f32 %v701, %v711
        %v719 = vmul.f32 %v697, %v715
        %v720 = vmul.f32 %v702, %v711
        %v721 = vmul.f32 %v698, %v715
        %v722 = vmul.f32 %v703, %v711
        %v723 = vmul.f32 %v699, %v715
        %v724 = vmul.f32 %v704, %v711
        %v725 = vmul.f32 %v700, %v715
        %v726 = vpack.c.bf16 %v720, %v718
        %v727 = vpack.c.bf16 %v721, %v719
        %v728 = vpack.c.bf16 %v724, %v722
        %v729 = vpack.c.bf16 %v725, %v723
        %s730 = scalar_lea.vmem [#allocation2], 32
        %v731 = vld [vmem:[%s730] sm:$0xf]
        %v732 = vld [vmem:[%s730 + $0x4] sm:$0xf]
        %v733 = vld [vmem:[%s730 + $0x8] sm:$0xf]
        %v734 = vld [vmem:[%s730 + $0xc] sm:$0xf]
        %v739 = vunpack.c.l.b16 %v731
        %v740 = vunpack.c.l.b16 %v732
        %v741 = vunpack.c.l.b16 %v733
        %v742 = vunpack.c.l.b16 %v734
        %v743 = vpack.c.b16 %v740, %v739
        %v744 = vpack.c.b16 %v742, %v741
        %v746 = vsel %vm551, %v743, 0
        %v749 = vsel %vm551, %v744, 0
        %751 = vmatprep.subr.bf16.mxu0 %v727
        %752 = vmatpush1.bf16.msra.mxu0 %v726
        %753 = vmatprep.subr.bf16.mxu0 %v729
        %754 = vmatpush1.bf16.msra.mxu0 %v728
        %755 = vmatprep.subr.bf16.mxu0 0
        %756 = vmatpush1.bf16.msra.mxu0 0
        %757 = vmatprep.subr.bf16.mxu0 0
        %758 = vmatpush1.bf16.msra.mxu0 0
        %759 = vmatprep.subr.bf16.mxu0 0
        %760 = vmatpush1.bf16.msra.mxu0 0
        %761 = vmatprep.subr.bf16.mxu0 0
        %762 = vmatpush1.bf16.msra.mxu0 0
        %763 = vmatprep.subr.bf16.mxu0 0
        %764 = vmatpush1.bf16.msra.mxu0 0
        %765 = vmatprep.subr.bf16.mxu0 0
        %766 = vmatpush1.bf16.msra.mxu0 0
        %767 = vmatprep.subr.bf16.mxu0 0
        %768 = vmatpush1.bf16.msra.mxu0 0
        %769 = vmatprep.subr.bf16.mxu0 0
        %770 = vmatpush1.bf16.msra.mxu0 0
        %771 = vmatprep.subr.bf16.mxu0 0
        %772 = vmatpush1.bf16.msra.mxu0 0
        %773 = vmatprep.subr.bf16.mxu0 0
        %774 = vmatpush1.bf16.msra.mxu0 0
        %775 = vmatprep.subr.bf16.mxu0 0
        %776 = vmatpush1.bf16.msra.mxu0 0
        %777 = vmatprep.subr.bf16.mxu0 0
        %778 = vmatpush1.bf16.msra.mxu0 0
        %779 = vmatprep.subr.bf16.mxu0 0
        %780 = vmatpush1.bf16.msra.mxu0 0
        %781 = vmatprep.subr.bf16.mxu0 0
        %782 = vmatpush1.bf16.msra.mxu0 0
        %783 = vmatprep.mubr.bf16.mxu0 0
        %784 = vmatmul.mubr.bf16.gmra.mrb[0].mxu0 %v746
        %v785 = vpop.f32.mrb[0].mxu0
        %v786 = vadd.f32 0.0, %v785
        %v787 = vpop.f32.mrb[0].mxu0
        %v788 = vadd.f32 0.0, %v787
        %v789 = vpop.f32.mrb[0].mxu0
        %v790 = vadd.f32 0.0, %v789
        %v791 = vpop.f32.mrb[0].mxu0
        %v792 = vadd.f32 0.0, %v791
        %793 = vmatprep.mubr.bf16.mxu0 0
        %794 = vmatmul.mubr.bf16.gmra.mrb[0].mxu0 %v749
        %v795 = vpop.f32.mrb[0].mxu0
        %v796 = vadd.f32 0.0, %v795
        %v797 = vpop.f32.mrb[0].mxu0
        %v798 = vadd.f32 0.0, %v797
        %v799 = vpop.f32.mrb[0].mxu0
        %v800 = vadd.f32 0.0, %v799
        %v801 = vpop.f32.mrb[0].mxu0
        %v802 = vadd.f32 0.0, %v801
        %803 = vdwg.mxu0
        %v804 = vadd.f32 %v662, %v786
        %v805 = vadd.f32 %v664, %v788
        %v806 = vadd.f32 %v666, %v790
        %v807 = vadd.f32 %v668, %v792
        %v808 = vadd.f32 %v672, %v796
        %v809 = vadd.f32 %v674, %v798
        %v810 = vadd.f32 %v676, %v800
        %v811 = vadd.f32 %v678, %v802
        %812 = vrot.lane.b32.xlu0 %v413, 1
        %v813 = vpop.permute.xlu0 %812
        %814 = vrot.lane.b32.xlu0 %v417, 1
        %v815 = vpop.permute.xlu0 %814
        %816 = vrot.lane.b32.xlu0 %v423, 1
        %v817 = vpop.permute.xlu0 %816
        %818 = vrot.lane.b32.xlu0 %v427, 1
        %v819 = vpop.permute.xlu0 %818
        %820 = vrot.lane.b32.xlu0 %v415, 1
        %v821 = vpop.permute.xlu0 %820
        %822 = vrot.lane.b32.xlu0 %v419, 1
        %v823 = vpop.permute.xlu0 %822
        %824 = vrot.lane.b32.xlu0 %v425, 1
        %v825 = vpop.permute.xlu0 %824
        %826 = vrot.lane.b32.xlu0 %v429, 1
        %v827 = vpop.permute.xlu0 %826
        %vm828 = vcmp.lt.s32.totalorder %v448, 1
        %v829 = vsel %vm828, %v813, %v821
        %v830 = vsel %vm828, %v815, %v823
        %v831 = vsel %vm828, %v817, %v825
        %v832 = vsel %vm828, %v819, %v827
        %v833 = vsel %vm828, %v821, %v813
        %v834 = vsel %vm828, %v823, %v815
        %v835 = vsel %vm828, %v825, %v817
        %v836 = vsel %vm828, %v827, %v819
        %s837 = scalar_lea.vmem %s7, 6
        %v838 = vld [vmem:[%s837] sm:$0x3]
        %v840 = vlaneseq
        %v841 = vshrl.u32 %v840, 7
        %v842 = vsub.s32 0, %v841
        %v843 = vrot.slane %v838, %v842
        %v844 = vlaneseq
        %v845 = vshrl.u32 %v844, 7
        %v846 = vsub.s32 1, %v845
        %v847 = vrot.slane %v838, %v846
        %v850 = vmul.f32 %v833, %v843
        %v851 = vmul.f32 %v829, %v847
        %v852 = vmul.f32 %v834, %v843
        %v853 = vmul.f32 %v830, %v847
        %v854 = vmul.f32 %v835, %v843
        %v855 = vmul.f32 %v831, %v847
        %v856 = vmul.f32 %v836, %v843
        %v857 = vmul.f32 %v832, %v847
        %v858 = vpack.c.bf16 %v852, %v850
        %v859 = vpack.c.bf16 %v853, %v851
        %v860 = vpack.c.bf16 %v856, %v854
        %v861 = vpack.c.bf16 %v857, %v855
        %s862 = scalar_lea.vmem [#allocation2], 48
        %v863 = vld [vmem:[%s862] sm:$0xf]
        %v864 = vld [vmem:[%s862 + $0x4] sm:$0xf]
        %v865 = vld [vmem:[%s862 + $0x8] sm:$0xf]
        %v866 = vld [vmem:[%s862 + $0xc] sm:$0xf]
        %v871 = vunpack.c.l.b16 %v863
        %v872 = vunpack.c.l.b16 %v864
        %v873 = vunpack.c.l.b16 %v865
        %v874 = vunpack.c.l.b16 %v866
        %v875 = vpack.c.b16 %v872, %v871
        %v876 = vpack.c.b16 %v874, %v873
        %v878 = vsel %vm551, %v875, 0
        %v881 = vsel %vm551, %v876, 0
        %883 = vmatprep.subr.bf16.mxu0 %v859
        %884 = vmatpush1.bf16.msra.mxu0 %v858
        %885 = vmatprep.subr.bf16.mxu0 %v861
        %886 = vmatpush1.bf16.msra.mxu0 %v860
        %887 = vmatprep.subr.bf16.mxu0 0
        %888 = vmatpush1.bf16.msra.mxu0 0
        %889 = vmatprep.subr.bf16.mxu0 0
        %890 = vmatpush1.bf16.msra.mxu0 0
        %891 = vmatprep.subr.bf16.mxu0 0
        %892 = vmatpush1.bf16.msra.mxu0 0
        %893 = vmatprep.subr.bf16.mxu0 0
        %894 = vmatpush1.bf16.msra.mxu0 0
        %895 = vmatprep.subr.bf16.mxu0 0
        %896 = vmatpush1.bf16.msra.mxu0 0
        %897 = vmatprep.subr.bf16.mxu0 0
        %898 = vmatpush1.bf16.msra.mxu0 0
        %899 = vmatprep.subr.bf16.mxu0 0
        %900 = vmatpush1.bf16.msra.mxu0 0
        %901 = vmatprep.subr.bf16.mxu0 0
        %902 = vmatpush1.bf16.msra.mxu0 0
        %903 = vmatprep.subr.bf16.mxu0 0
        %904 = vmatpush1.bf16.msra.mxu0 0
        %905 = vmatprep.subr.bf16.mxu0 0
        %906 = vmatpush1.bf16.msra.mxu0 0
        %907 = vmatprep.subr.bf16.mxu0 0
        %908 = vmatpush1.bf16.msra.mxu0 0
        %909 = vmatprep.subr.bf16.mxu0 0
        %910 = vmatpush1.bf16.msra.mxu0 0
        %911 = vmatprep.subr.bf16.mxu0 0
        %912 = vmatpush1.bf16.msra.mxu0 0
        %913 = vmatprep.subr.bf16.mxu0 0
        %914 = vmatpush1.bf16.msra.mxu0 0
        %915 = vmatprep.mubr.bf16.mxu0 0
        %916 = vmatmul.mubr.bf16.gmra.mrb[0].mxu0 %v878
        %v917 = vpop.f32.mrb[0].mxu0
        %v918 = vadd.f32 0.0, %v917
        %v919 = vpop.f32.mrb[0].mxu0
        %v920 = vadd.f32 0.0, %v919
        %v921 = vpop.f32.mrb[0].mxu0
        %v922 = vadd.f32 0.0, %v921
        %v923 = vpop.f32.mrb[0].mxu0
        %v924 = vadd.f32 0.0, %v923
        %925 = vmatprep.mubr.bf16.mxu0 0
        %926 = vmatmul.mubr.bf16.gmra.mrb[0].mxu0 %v881
        %v927 = vpop.f32.mrb[0].mxu0
        %v928 = vadd.f32 0.0, %v927
        %v929 = vpop.f32.mrb[0].mxu0
        %v930 = vadd.f32 0.0, %v929
        %v931 = vpop.f32.mrb[0].mxu0
        %v932 = vadd.f32 0.0, %v931
        %v933 = vpop.f32.mrb[0].mxu0
        %v934 = vadd.f32 0.0, %v933
        %935 = vdwg.mxu0
        %v936 = vadd.f32 %v804, %v918
        %v937 = vadd.f32 %v805, %v920
        %v938 = vadd.f32 %v806, %v922
        %v939 = vadd.f32 %v807, %v924
        %v940 = vadd.f32 %v808, %v928
        %v941 = vadd.f32 %v809, %v930
        %v942 = vadd.f32 %v810, %v932
        %v943 = vadd.f32 %v811, %v934
        %s944 = scalar_lea.vmem %s7, 8
        %v945 = vld [vmem:[%s944] sm:$0x3]
        %v947 = vlaneseq
        %v948 = vshrl.u32 %v947, 7
        %v949 = vsub.s32 0, %v948
        %v950 = vrot.slane %v945, %v949
        %v951 = vlaneseq
        %v952 = vshrl.u32 %v951, 7
        %v953 = vsub.s32 1, %v952
        %v954 = vrot.slane %v945, %v953
        %v957 = vmul.f32 %v413, %v950
        %v958 = vmul.f32 %v415, %v954
        %v959 = vmul.f32 %v417, %v950
        %v960 = vmul.f32 %v419, %v954
        %v961 = vmul.f32 %v423, %v950
        %v962 = vmul.f32 %v425, %v954
        %v963 = vmul.f32 %v427, %v950
        %v964 = vmul.f32 %v429, %v954
        %v965 = vpack.c.bf16 %v959, %v957
        %v966 = vpack.c.bf16 %v960, %v958
        %v967 = vpack.c.bf16 %v963, %v961
        %v968 = vpack.c.bf16 %v964, %v962
        %s969 = scalar_lea.vmem [#allocation2], 64
        %v970 = vld [vmem:[%s969] sm:$0xf]
        %v971 = vld [vmem:[%s969 + $0x4] sm:$0xf]
        %v972 = vld [vmem:[%s969 + $0x8] sm:$0xf]
        %v973 = vld [vmem:[%s969 + $0xc] sm:$0xf]
        %v978 = vunpack.c.l.b16 %v970
        %v979 = vunpack.c.l.b16 %v971
        %v980 = vunpack.c.l.b16 %v972
        %v981 = vunpack.c.l.b16 %v973
        %v982 = vpack.c.b16 %v979, %v978
        %v983 = vpack.c.b16 %v981, %v980
        %v985 = vsel %vm551, %v982, 0
        %v988 = vsel %vm551, %v983, 0
        %990 = vmatprep.subr.bf16.mxu0 %v966
        %991 = vmatpush1.bf16.msra.mxu0 %v965
        %992 = vmatprep.subr.bf16.mxu0 %v968
        %993 = vmatpush1.bf16.msra.mxu0 %v967
        %994 = vmatprep.subr.bf16.mxu0 0
        %995 = vmatpush1.bf16.msra.mxu0 0
        %996 = vmatprep.subr.bf16.mxu0 0
        %997 = vmatpush1.bf16.msra.mxu0 0
        %998 = vmatprep.subr.bf16.mxu0 0
        %999 = vmatpush1.bf16.msra.mxu0 0
        %1000 = vmatprep.subr.bf16.mxu0 0
        %1001 = vmatpush1.bf16.msra.mxu0 0
        %1002 = vmatprep.subr.bf16.mxu0 0
        %1003 = vmatpush1.bf16.msra.mxu0 0
        %1004 = vmatprep.subr.bf16.mxu0 0
        %1005 = vmatpush1.bf16.msra.mxu0 0
        %1006 = vmatprep.subr.bf16.mxu0 0
        %1007 = vmatpush1.bf16.msra.mxu0 0
        %1008 = vmatprep.subr.bf16.mxu0 0
        %1009 = vmatpush1.bf16.msra.mxu0 0
        %1010 = vmatprep.subr.bf16.mxu0 0
        %1011 = vmatpush1.bf16.msra.mxu0 0
        %1012 = vmatprep.subr.bf16.mxu0 0
        %1013 = vmatpush1.bf16.msra.mxu0 0
        %1014 = vmatprep.subr.bf16.mxu0 0
        %1015 = vmatpush1.bf16.msra.mxu0 0
        %1016 = vmatprep.subr.bf16.mxu0 0
        %1017 = vmatpush1.bf16.msra.mxu0 0
        %1018 = vmatprep.subr.bf16.mxu0 0
        %1019 = vmatpush1.bf16.msra.mxu0 0
        %1020 = vmatprep.subr.bf16.mxu0 0
        %1021 = vmatpush1.bf16.msra.mxu0 0
        %1022 = vmatprep.mubr.bf16.mxu0 0
        %1023 = vmatmul.mubr.bf16.gmra.mrb[0].mxu0 %v985
        %v1024 = vpop.f32.mrb[0].mxu0
        %v1025 = vadd.f32 0.0, %v1024
        %v1026 = vpop.f32.mrb[0].mxu0
        %v1027 = vadd.f32 0.0, %v1026
        %v1028 = vpop.f32.mrb[0].mxu0
        %v1029 = vadd.f32 0.0, %v1028
        %v1030 = vpop.f32.mrb[0].mxu0
        %v1031 = vadd.f32 0.0, %v1030
        %1032 = vmatprep.mubr.bf16.mxu0 0
        %1033 = vmatmul.mubr.bf16.gmra.mrb[0].mxu0 %v988
        %v1034 = vpop.f32.mrb[0].mxu0
        %v1035 = vadd.f32 0.0, %v1034
        %v1036 = vpop.f32.mrb[0].mxu0
        %v1037 = vadd.f32 0.0, %v1036
        %v1038 = vpop.f32.mrb[0].mxu0
        %v1039 = vadd.f32 0.0, %v1038
        %v1040 = vpop.f32.mrb[0].mxu0
        %v1041 = vadd.f32 0.0, %v1040
        %1042 = vdwg.mxu0
        %v1043 = vadd.f32 %v936, %v1025
        %v1044 = vadd.f32 %v937, %v1027
        %v1045 = vadd.f32 %v938, %v1029
        %v1046 = vadd.f32 %v939, %v1031
        %v1047 = vadd.f32 %v940, %v1035
        %v1048 = vadd.f32 %v941, %v1037
        %v1049 = vadd.f32 %v942, %v1039
        %v1050 = vadd.f32 %v943, %v1041
        %1051 = vrot.lane.b32.xlu0 %v413, 127
        %v1052 = vpop.permute.xlu0 %1051
        %1053 = vrot.lane.b32.xlu0 %v417, 127
        %v1054 = vpop.permute.xlu0 %1053
        %1055 = vrot.lane.b32.xlu0 %v423, 127
        %v1056 = vpop.permute.xlu0 %1055
        %1057 = vrot.lane.b32.xlu0 %v427, 127
        %v1058 = vpop.permute.xlu0 %1057
        %1059 = vrot.lane.b32.xlu0 %v415, 127
        %v1060 = vpop.permute.xlu0 %1059
        %1061 = vrot.lane.b32.xlu0 %v419, 127
        %v1062 = vpop.permute.xlu0 %1061
        %1063 = vrot.lane.b32.xlu0 %v425, 127
        %v1064 = vpop.permute.xlu0 %1063
        %1065 = vrot.lane.b32.xlu0 %v429, 127
        %v1066 = vpop.permute.xlu0 %1065
        %vm1067 = vcmp.lt.s32.totalorder %v448, 127
        %v1068 = vsel %vm1067, %v1052, %v1060
        %v1069 = vsel %vm1067, %v1054, %v1062
        %v1070 = vsel %vm1067, %v1056, %v1064
        %v1071 = vsel %vm1067, %v1058, %v1066
        %v1072 = vsel %vm1067, %v1060, %v1052
        %v1073 = vsel %vm1067, %v1062, %v1054
        %v1074 = vsel %vm1067, %v1064, %v1056
        %v1075 = vsel %vm1067, %v1066, %v1058
        %s1076 = scalar_lea.vmem %s7, 10
        %v1077 = vld [vmem:[%s1076] sm:$0x3]
        %v1079 = vlaneseq
        %v1080 = vshrl.u32 %v1079, 7
        %v1081 = vsub.s32 0, %v1080
        %v1082 = vrot.slane %v1077, %v1081
        %v1083 = vlaneseq
        %v1084 = vshrl.u32 %v1083, 7
        %v1085 = vsub.s32 1, %v1084
        %v1086 = vrot.slane %v1077, %v1085
        %v1089 = vmul.f32 %v1068, %v1082
        %v1090 = vmul.f32 %v1072, %v1086
        %v1091 = vmul.f32 %v1069, %v1082
        %v1092 = vmul.f32 %v1073, %v1086
        %v1093 = vmul.f32 %v1070, %v1082
        %v1094 = vmul.f32 %v1074, %v1086
        %v1095 = vmul.f32 %v1071, %v1082
        %v1096 = vmul.f32 %v1075, %v1086
        %v1097 = vpack.c.bf16 %v1091, %v1089
        %v1098 = vpack.c.bf16 %v1092, %v1090
        %v1099 = vpack.c.bf16 %v1095, %v1093
        %v1100 = vpack.c.bf16 %v1096, %v1094
        %s1101 = scalar_lea.vmem [#allocation2], 80
        %v1102 = vld [vmem:[%s1101] sm:$0xf]
        %v1103 = vld [vmem:[%s1101 + $0x4] sm:$0xf]
        %v1104 = vld [vmem:[%s1101 + $0x8] sm:$0xf]
        %v1105 = vld [vmem:[%s1101 + $0xc] sm:$0xf]
        %v1110 = vunpack.c.l.b16 %v1102
        %v1111 = vunpack.c.l.b16 %v1103
        %v1112 = vunpack.c.l.b16 %v1104
        %v1113 = vunpack.c.l.b16 %v1105
        %v1114 = vpack.c.b16 %v1111, %v1110
        %v1115 = vpack.c.b16 %v1113, %v1112
        %v1117 = vsel %vm551, %v1114, 0
        %v1120 = vsel %vm551, %v1115, 0
        %1122 = vmatprep.subr.bf16.mxu0 %v1098
        %1123 = vmatpush1.bf16.msra.mxu0 %v1097
        %1124 = vmatprep.subr.bf16.mxu0 %v1100
        %1125 = vmatpush1.bf16.msra.mxu0 %v1099
        %1126 = vmatprep.subr.bf16.mxu0 0
        %1127 = vmatpush1.bf16.msra.mxu0 0
        %1128 = vmatprep.subr.bf16.mxu0 0
        %1129 = vmatpush1.bf16.msra.mxu0 0
        %1130 = vmatprep.subr.bf16.mxu0 0
        %1131 = vmatpush1.bf16.msra.mxu0 0
        %1132 = vmatprep.subr.bf16.mxu0 0
        %1133 = vmatpush1.bf16.msra.mxu0 0
        %1134 = vmatprep.subr.bf16.mxu0 0
        %1135 = vmatpush1.bf16.msra.mxu0 0
        %1136 = vmatprep.subr.bf16.mxu0 0
        %1137 = vmatpush1.bf16.msra.mxu0 0
        %1138 = vmatprep.subr.bf16.mxu0 0
        %1139 = vmatpush1.bf16.msra.mxu0 0
        %1140 = vmatprep.subr.bf16.mxu0 0
        %1141 = vmatpush1.bf16.msra.mxu0 0
        %1142 = vmatprep.subr.bf16.mxu0 0
        %1143 = vmatpush1.bf16.msra.mxu0 0
        %1144 = vmatprep.subr.bf16.mxu0 0
        %1145 = vmatpush1.bf16.msra.mxu0 0
        %1146 = vmatprep.subr.bf16.mxu0 0
        %1147 = vmatpush1.bf16.msra.mxu0 0
        %1148 = vmatprep.subr.bf16.mxu0 0
        %1149 = vmatpush1.bf16.msra.mxu0 0
        %1150 = vmatprep.subr.bf16.mxu0 0
        %1151 = vmatpush1.bf16.msra.mxu0 0
        %1152 = vmatprep.subr.bf16.mxu0 0
        %1153 = vmatpush1.bf16.msra.mxu0 0
        %1154 = vmatprep.mubr.bf16.mxu0 0
        %1155 = vmatmul.mubr.bf16.gmra.mrb[0].mxu0 %v1117
        %v1156 = vpop.f32.mrb[0].mxu0
        %v1157 = vadd.f32 0.0, %v1156
        %v1158 = vpop.f32.mrb[0].mxu0
        %v1159 = vadd.f32 0.0, %v1158
        %v1160 = vpop.f32.mrb[0].mxu0
        %v1161 = vadd.f32 0.0, %v1160
        %v1162 = vpop.f32.mrb[0].mxu0
        %v1163 = vadd.f32 0.0, %v1162
        %1164 = vmatprep.mubr.bf16.mxu0 0
        %1165 = vmatmul.mubr.bf16.gmra.mrb[0].mxu0 %v1120
        %v1166 = vpop.f32.mrb[0].mxu0
        %v1167 = vadd.f32 0.0, %v1166
        %v1168 = vpop.f32.mrb[0].mxu0
        %v1169 = vadd.f32 0.0, %v1168
        %v1170 = vpop.f32.mrb[0].mxu0
        %v1171 = vadd.f32 0.0, %v1170
        %v1172 = vpop.f32.mrb[0].mxu0
        %v1173 = vadd.f32 0.0, %v1172
        %1174 = vdwg.mxu0
        %v1175 = vadd.f32 %v1043, %v1157
        %v1176 = vadd.f32 %v1044, %v1159
        %v1177 = vadd.f32 %v1045, %v1161
        %v1178 = vadd.f32 %v1046, %v1163
        %v1179 = vadd.f32 %v1047, %v1167
        %v1180 = vadd.f32 %v1048, %v1169
        %v1181 = vadd.f32 %v1049, %v1171
        %v1182 = vadd.f32 %v1050, %v1173
        %1183 = vrot.lane.b32.xlu0 %v413, 113
        %v1184 = vpop.permute.xlu0 %1183
        %1185 = vrot.lane.b32.xlu0 %v417, 113
        %v1186 = vpop.permute.xlu0 %1185
        %1187 = vrot.lane.b32.xlu0 %v423, 113
        %v1188 = vpop.permute.xlu0 %1187
        %1189 = vrot.lane.b32.xlu0 %v427, 113
        %v1190 = vpop.permute.xlu0 %1189
        %1191 = vrot.lane.b32.xlu0 %v415, 113
        %v1192 = vpop.permute.xlu0 %1191
        %1193 = vrot.lane.b32.xlu0 %v419, 113
        %v1194 = vpop.permute.xlu0 %1193
        %1195 = vrot.lane.b32.xlu0 %v425, 113
        %v1196 = vpop.permute.xlu0 %1195
        %1197 = vrot.lane.b32.xlu0 %v429, 113
        %v1198 = vpop.permute.xlu0 %1197
        %vm1199 = vcmp.lt.s32.totalorder %v448, 113
        %v1200 = vsel %vm1199, %v1184, %v1192
        %v1201 = vsel %vm1199, %v1186, %v1194
        %v1202 = vsel %vm1199, %v1188, %v1196
        %v1203 = vsel %vm1199, %v1190, %v1198
        %v1204 = vsel %vm1199, %v1192, %v1184
        %v1205 = vsel %vm1199, %v1194, %v1186
        %v1206 = vsel %vm1199, %v1196, %v1188
        %v1207 = vsel %vm1199, %v1198, %v1190
        %s1208 = scalar_lea.vmem %s7, 12
        %v1209 = vld [vmem:[%s1208] sm:$0x3]
        %v1211 = vlaneseq
        %v1212 = vshrl.u32 %v1211, 7
        %v1213 = vsub.s32 0, %v1212
        %v1214 = vrot.slane %v1209, %v1213
        %v1215 = vlaneseq
        %v1216 = vshrl.u32 %v1215, 7
        %v1217 = vsub.s32 1, %v1216
        %v1218 = vrot.slane %v1209, %v1217
        %v1221 = vmul.f32 %v1200, %v1214
        %v1222 = vmul.f32 %v1204, %v1218
        %v1223 = vmul.f32 %v1201, %v1214
        %v1224 = vmul.f32 %v1205, %v1218
        %v1225 = vmul.f32 %v1202, %v1214
        %v1226 = vmul.f32 %v1206, %v1218
        %v1227 = vmul.f32 %v1203, %v1214
        %v1228 = vmul.f32 %v1207, %v1218
        %v1229 = vpack.c.bf16 %v1223, %v1221
        %v1230 = vpack.c.bf16 %v1224, %v1222
        %v1231 = vpack.c.bf16 %v1227, %v1225
        %v1232 = vpack.c.bf16 %v1228, %v1226
        %s1233 = scalar_lea.vmem [#allocation2], 96
        %v1234 = vld [vmem:[%s1233] sm:$0xf]
        %v1235 = vld [vmem:[%s1233 + $0x4] sm:$0xf]
        %v1236 = vld [vmem:[%s1233 + $0x8] sm:$0xf]
        %v1237 = vld [vmem:[%s1233 + $0xc] sm:$0xf]
        %v1242 = vunpack.c.l.b16 %v1234
        %v1243 = vunpack.c.l.b16 %v1235
        %v1244 = vunpack.c.l.b16 %v1236
        %v1245 = vunpack.c.l.b16 %v1237
        %v1246 = vpack.c.b16 %v1243, %v1242
        %v1247 = vpack.c.b16 %v1245, %v1244
        %v1249 = vsel %vm551, %v1246, 0
        %v1252 = vsel %vm551, %v1247, 0
        %1254 = vmatprep.subr.bf16.mxu0 %v1230
        %1255 = vmatpush1.bf16.msra.mxu0 %v1229
        %1256 = vmatprep.subr.bf16.mxu0 %v1232
        %1257 = vmatpush1.bf16.msra.mxu0 %v1231
        %1258 = vmatprep.subr.bf16.mxu0 0
        %1259 = vmatpush1.bf16.msra.mxu0 0
        %1260 = vmatprep.subr.bf16.mxu0 0
        %1261 = vmatpush1.bf16.msra.mxu0 0
        %1262 = vmatprep.subr.bf16.mxu0 0
        %1263 = vmatpush1.bf16.msra.mxu0 0
        %1264 = vmatprep.subr.bf16.mxu0 0
        %1265 = vmatpush1.bf16.msra.mxu0 0
        %1266 = vmatprep.subr.bf16.mxu0 0
        %1267 = vmatpush1.bf16.msra.mxu0 0
        %1268 = vmatprep.subr.bf16.mxu0 0
        %1269 = vmatpush1.bf16.msra.mxu0 0
        %1270 = vmatprep.subr.bf16.mxu0 0
        %1271 = vmatpush1.bf16.msra.mxu0 0
        %1272 = vmatprep.subr.bf16.mxu0 0
        %1273 = vmatpush1.bf16.msra.mxu0 0
        %1274 = vmatprep.subr.bf16.mxu0 0
        %1275 = vmatpush1.bf16.msra.mxu0 0
        %1276 = vmatprep.subr.bf16.mxu0 0
        %1277 = vmatpush1.bf16.msra.mxu0 0
        %1278 = vmatprep.subr.bf16.mxu0 0
        %1279 = vmatpush1.bf16.msra.mxu0 0
        %1280 = vmatprep.subr.bf16.mxu0 0
        %1281 = vmatpush1.bf16.msra.mxu0 0
        %1282 = vmatprep.subr.bf16.mxu0 0
        %1283 = vmatpush1.bf16.msra.mxu0 0
        %1284 = vmatprep.subr.bf16.mxu0 0
        %1285 = vmatpush1.bf16.msra.mxu0 0
        %1286 = vmatprep.mubr.bf16.mxu0 0
        %1287 = vmatmul.mubr.bf16.gmra.mrb[0].mxu0 %v1249
        %v1288 = vpop.f32.mrb[0].mxu0
        %v1289 = vadd.f32 0.0, %v1288
        %v1290 = vpop.f32.mrb[0].mxu0
        %v1291 = vadd.f32 0.0, %v1290
        %v1292 = vpop.f32.mrb[0].mxu0
        %v1293 = vadd.f32 0.0, %v1292
        %v1294 = vpop.f32.mrb[0].mxu0
        %v1295 = vadd.f32 0.0, %v1294
        %1296 = vmatprep.mubr.bf16.mxu0 0
        %1297 = vmatmul.mubr.bf16.gmra.mrb[0].mxu0 %v1252
        %v1298 = vpop.f32.mrb[0].mxu0
        %v1299 = vadd.f32 0.0, %v1298
        %v1300 = vpop.f32.mrb[0].mxu0
        %v1301 = vadd.f32 0.0, %v1300
        %v1302 = vpop.f32.mrb[0].mxu0
        %v1303 = vadd.f32 0.0, %v1302
        %v1304 = vpop.f32.mrb[0].mxu0
        %v1305 = vadd.f32 0.0, %v1304
        %1306 = vdwg.mxu0
        %v1307 = vadd.f32 %v1175, %v1289
        %v1308 = vadd.f32 %v1176, %v1291
        %v1309 = vadd.f32 %v1177, %v1293
        %v1310 = vadd.f32 %v1178, %v1295
        %v1311 = vadd.f32 %v1179, %v1299
        %v1312 = vadd.f32 %v1180, %v1301
        %v1313 = vadd.f32 %v1181, %v1303
        %v1314 = vadd.f32 %v1182, %v1305
        %1315 = vrot.lane.b32.xlu0 %v413, 112
        %v1316 = vpop.permute.xlu0 %1315
        %1317 = vrot.lane.b32.xlu0 %v417, 112
        %v1318 = vpop.permute.xlu0 %1317
        %1319 = vrot.lane.b32.xlu0 %v423, 112
        %v1320 = vpop.permute.xlu0 %1319
        %1321 = vrot.lane.b32.xlu0 %v427, 112
        %v1322 = vpop.permute.xlu0 %1321
        %1323 = vrot.lane.b32.xlu0 %v415, 112
        %v1324 = vpop.permute.xlu0 %1323
        %1325 = vrot.lane.b32.xlu0 %v419, 112
        %v1326 = vpop.permute.xlu0 %1325
        %1327 = vrot.lane.b32.xlu0 %v425, 112
        %v1328 = vpop.permute.xlu0 %1327
        %1329 = vrot.lane.b32.xlu0 %v429, 112
        %v1330 = vpop.permute.xlu0 %1329
        %vm1331 = vcmp.lt.s32.totalorder %v448, 112
        %v1332 = vsel %vm1331, %v1316, %v1324
        %v1333 = vsel %vm1331, %v1318, %v1326
        %v1334 = vsel %vm1331, %v1320, %v1328
        %v1335 = vsel %vm1331, %v1322, %v1330
        %v1336 = vsel %vm1331, %v1324, %v1316
        %v1337 = vsel %vm1331, %v1326, %v1318
        %v1338 = vsel %vm1331, %v1328, %v1320
        %v1339 = vsel %vm1331, %v1330, %v1322
        %s1340 = scalar_lea.vmem %s7, 14
        %v1341 = vld [vmem:[%s1340] sm:$0x3]
        %v1343 = vlaneseq
        %v1344 = vshrl.u32 %v1343, 7
        %v1345 = vsub.s32 0, %v1344
        %v1346 = vrot.slane %v1341, %v1345
        %v1347 = vlaneseq
        %v1348 = vshrl.u32 %v1347, 7
        %v1349 = vsub.s32 1, %v1348
        %v1350 = vrot.slane %v1341, %v1349
        %v1353 = vmul.f32 %v1332, %v1346
        %v1354 = vmul.f32 %v1336, %v1350
        %v1355 = vmul.f32 %v1333, %v1346
        %v1356 = vmul.f32 %v1337, %v1350
        %v1357 = vmul.f32 %v1334, %v1346
        %v1358 = vmul.f32 %v1338, %v1350
        %v1359 = vmul.f32 %v1335, %v1346
        %v1360 = vmul.f32 %v1339, %v1350
        %v1361 = vpack.c.bf16 %v1355, %v1353
        %v1362 = vpack.c.bf16 %v1356, %v1354
        %v1363 = vpack.c.bf16 %v1359, %v1357
        %v1364 = vpack.c.bf16 %v1360, %v1358
        %s1365 = scalar_lea.vmem [#allocation2], 112
        %v1366 = vld [vmem:[%s1365] sm:$0xf]
        %v1367 = vld [vmem:[%s1365 + $0x4] sm:$0xf]
        %v1368 = vld [vmem:[%s1365 + $0x8] sm:$0xf]
        %v1369 = vld [vmem:[%s1365 + $0xc] sm:$0xf]
        %v1374 = vunpack.c.l.b16 %v1366
        %v1375 = vunpack.c.l.b16 %v1367
        %v1376 = vunpack.c.l.b16 %v1368
        %v1377 = vunpack.c.l.b16 %v1369
        %v1378 = vpack.c.b16 %v1375, %v1374
        %v1379 = vpack.c.b16 %v1377, %v1376
        %v1381 = vsel %vm551, %v1378, 0
        %v1384 = vsel %vm551, %v1379, 0
        %1386 = vmatprep.subr.bf16.mxu0 %v1362
        %1387 = vmatpush1.bf16.msra.mxu0 %v1361
        %1388 = vmatprep.subr.bf16.mxu0 %v1364
        %1389 = vmatpush1.bf16.msra.mxu0 %v1363
        %1390 = vmatprep.subr.bf16.mxu0 0
        %1391 = vmatpush1.bf16.msra.mxu0 0
        %1392 = vmatprep.subr.bf16.mxu0 0
        %1393 = vmatpush1.bf16.msra.mxu0 0
        %1394 = vmatprep.subr.bf16.mxu0 0
        %1395 = vmatpush1.bf16.msra.mxu0 0
        %1396 = vmatprep.subr.bf16.mxu0 0
        %1397 = vmatpush1.bf16.msra.mxu0 0
        %1398 = vmatprep.subr.bf16.mxu0 0
        %1399 = vmatpush1.bf16.msra.mxu0 0
        %1400 = vmatprep.subr.bf16.mxu0 0
        %1401 = vmatpush1.bf16.msra.mxu0 0
        %1402 = vmatprep.subr.bf16.mxu0 0
        %1403 = vmatpush1.bf16.msra.mxu0 0
        %1404 = vmatprep.subr.bf16.mxu0 0
        %1405 = vmatpush1.bf16.msra.mxu0 0
        %1406 = vmatprep.subr.bf16.mxu0 0
        %1407 = vmatpush1.bf16.msra.mxu0 0
        %1408 = vmatprep.subr.bf16.mxu0 0
        %1409 = vmatpush1.bf16.msra.mxu0 0
        %1410 = vmatprep.subr.bf16.mxu0 0
        %1411 = vmatpush1.bf16.msra.mxu0 0
        %1412 = vmatprep.subr.bf16.mxu0 0
        %1413 = vmatpush1.bf16.msra.mxu0 0
        %1414 = vmatprep.subr.bf16.mxu0 0
        %1415 = vmatpush1.bf16.msra.mxu0 0
        %1416 = vmatprep.subr.bf16.mxu0 0
        %1417 = vmatpush1.bf16.msra.mxu0 0
        %1418 = vmatprep.mubr.bf16.mxu0 0
        %1419 = vmatmul.mubr.bf16.gmra.mrb[0].mxu0 %v1381
        %v1420 = vpop.f32.mrb[0].mxu0
        %v1421 = vadd.f32 0.0, %v1420
        %v1422 = vpop.f32.mrb[0].mxu0
        %v1423 = vadd.f32 0.0, %v1422
        %v1424 = vpop.f32.mrb[0].mxu0
        %v1425 = vadd.f32 0.0, %v1424
        %v1426 = vpop.f32.mrb[0].mxu0
        %v1427 = vadd.f32 0.0, %v1426
        %1428 = vmatprep.mubr.bf16.mxu0 0
        %1429 = vmatmul.mubr.bf16.gmra.mrb[0].mxu0 %v1384
        %v1430 = vpop.f32.mrb[0].mxu0
        %v1431 = vadd.f32 0.0, %v1430
        %v1432 = vpop.f32.mrb[0].mxu0
        %v1433 = vadd.f32 0.0, %v1432
        %v1434 = vpop.f32.mrb[0].mxu0
        %v1435 = vadd.f32 0.0, %v1434
        %v1436 = vpop.f32.mrb[0].mxu0
        %v1437 = vadd.f32 0.0, %v1436
        %1438 = vdwg.mxu0
        %v1439 = vadd.f32 %v1307, %v1421
        %v1440 = vadd.f32 %v1308, %v1423
        %v1441 = vadd.f32 %v1309, %v1425
        %v1442 = vadd.f32 %v1310, %v1427
        %v1443 = vadd.f32 %v1311, %v1431
        %v1444 = vadd.f32 %v1312, %v1433
        %v1445 = vadd.f32 %v1313, %v1435
        %v1446 = vadd.f32 %v1314, %v1437
        %1447 = vrot.lane.b32.xlu0 %v413, 111
        %v1448 = vpop.permute.xlu0 %1447
        %1449 = vrot.lane.b32.xlu0 %v417, 111
        %v1450 = vpop.permute.xlu0 %1449
        %1451 = vrot.lane.b32.xlu0 %v423, 111
        %v1452 = vpop.permute.xlu0 %1451
        %1453 = vrot.lane.b32.xlu0 %v427, 111
        %v1454 = vpop.permute.xlu0 %1453
        %1455 = vrot.lane.b32.xlu0 %v415, 111
        %v1456 = vpop.permute.xlu0 %1455
        %1457 = vrot.lane.b32.xlu0 %v419, 111
        %v1458 = vpop.permute.xlu0 %1457
        %1459 = vrot.lane.b32.xlu0 %v425, 111
        %v1460 = vpop.permute.xlu0 %1459
        %1461 = vrot.lane.b32.xlu0 %v429, 111
        %v1462 = vpop.permute.xlu0 %1461
        %vm1463 = vcmp.lt.s32.totalorder %v448, 111
        %v1464 = vsel %vm1463, %v1448, %v1456
        %v1465 = vsel %vm1463, %v1450, %v1458
        %v1466 = vsel %vm1463, %v1452, %v1460
        %v1467 = vsel %vm1463, %v1454, %v1462
        %v1468 = vsel %vm1463, %v1456, %v1448
        %v1469 = vsel %vm1463, %v1458, %v1450
        %v1470 = vsel %vm1463, %v1460, %v1452
        %v1471 = vsel %vm1463, %v1462, %v1454
        %s1472 = scalar_lea.vmem %s7, 16
        %v1473 = vld [vmem:[%s1472] sm:$0x3]
        %v1475 = vlaneseq
        %v1476 = vshrl.u32 %v1475, 7
        %v1477 = vsub.s32 0, %v1476
        %v1478 = vrot.slane %v1473, %v1477
        %v1479 = vlaneseq
        %v1480 = vshrl.u32 %v1479, 7
        %v1481 = vsub.s32 1, %v1480
        %v1482 = vrot.slane %v1473, %v1481
        %v1485 = vmul.f32 %v1464, %v1478
        %v1486 = vmul.f32 %v1468, %v1482
        %v1487 = vmul.f32 %v1465, %v1478
        %v1488 = vmul.f32 %v1469, %v1482
        %v1489 = vmul.f32 %v1466, %v1478
        %v1490 = vmul.f32 %v1470, %v1482
        %v1491 = vmul.f32 %v1467, %v1478
        %v1492 = vmul.f32 %v1471, %v1482
        %v1493 = vpack.c.bf16 %v1487, %v1485
        %v1494 = vpack.c.bf16 %v1488, %v1486
        %v1495 = vpack.c.bf16 %v1491, %v1489
        %v1496 = vpack.c.bf16 %v1492, %v1490
        %s1497 = scalar_lea.vmem [#allocation2], 128
        %v1498 = vld [vmem:[%s1497] sm:$0xf]
        %v1499 = vld [vmem:[%s1497 + $0x4] sm:$0xf]
        %v1500 = vld [vmem:[%s1497 + $0x8] sm:$0xf]
        %v1501 = vld [vmem:[%s1497 + $0xc] sm:$0xf]
        %v1506 = vunpack.c.l.b16 %v1498
        %v1507 = vunpack.c.l.b16 %v1499
        %v1508 = vunpack.c.l.b16 %v1500
        %v1509 = vunpack.c.l.b16 %v1501
        %v1510 = vpack.c.b16 %v1507, %v1506
        %v1511 = vpack.c.b16 %v1509, %v1508
        %v1513 = vsel %vm551, %v1510, 0
        %v1516 = vsel %vm551, %v1511, 0
        %1518 = vmatprep.subr.bf16.mxu0 %v1494
        %1519 = vmatpush1.bf16.msra.mxu0 %v1493
        %1520 = vmatprep.subr.bf16.mxu0 %v1496
        %1521 = vmatpush1.bf16.msra.mxu0 %v1495
        %1522 = vmatprep.subr.bf16.mxu0 0
        %1523 = vmatpush1.bf16.msra.mxu0 0
        %1524 = vmatprep.subr.bf16.mxu0 0
        %1525 = vmatpush1.bf16.msra.mxu0 0
        %1526 = vmatprep.subr.bf16.mxu0 0
        %1527 = vmatpush1.bf16.msra.mxu0 0
        %1528 = vmatprep.subr.bf16.mxu0 0
        %1529 = vmatpush1.bf16.msra.mxu0 0
        %1530 = vmatprep.subr.bf16.mxu0 0
        %1531 = vmatpush1.bf16.msra.mxu0 0
        %1532 = vmatprep.subr.bf16.mxu0 0
        %1533 = vmatpush1.bf16.msra.mxu0 0
        %1534 = vmatprep.subr.bf16.mxu0 0
        %1535 = vmatpush1.bf16.msra.mxu0 0
        %1536 = vmatprep.subr.bf16.mxu0 0
        %1537 = vmatpush1.bf16.msra.mxu0 0
        %1538 = vmatprep.subr.bf16.mxu0 0
        %1539 = vmatpush1.bf16.msra.mxu0 0
        %1540 = vmatprep.subr.bf16.mxu0 0
        %1541 = vmatpush1.bf16.msra.mxu0 0
        %1542 = vmatprep.subr.bf16.mxu0 0
        %1543 = vmatpush1.bf16.msra.mxu0 0
        %1544 = vmatprep.subr.bf16.mxu0 0
        %1545 = vmatpush1.bf16.msra.mxu0 0
        %1546 = vmatprep.subr.bf16.mxu0 0
        %1547 = vmatpush1.bf16.msra.mxu0 0
        %1548 = vmatprep.subr.bf16.mxu0 0
        %1549 = vmatpush1.bf16.msra.mxu0 0
        %1550 = vmatprep.mubr.bf16.mxu0 0
        %1551 = vmatmul.mubr.bf16.gmra.mrb[0].mxu0 %v1513
        %v1552 = vpop.f32.mrb[0].mxu0
        %v1553 = vadd.f32 0.0, %v1552
        %v1554 = vpop.f32.mrb[0].mxu0
        %v1555 = vadd.f32 0.0, %v1554
        %v1556 = vpop.f32.mrb[0].mxu0
        %v1557 = vadd.f32 0.0, %v1556
        %v1558 = vpop.f32.mrb[0].mxu0
        %v1559 = vadd.f32 0.0, %v1558
        %1560 = vmatprep.mubr.bf16.mxu0 0
        %1561 = vmatmul.mubr.bf16.gmra.mrb[0].mxu0 %v1516
        %v1562 = vpop.f32.mrb[0].mxu0
        %v1563 = vadd.f32 0.0, %v1562
        %v1564 = vpop.f32.mrb[0].mxu0
        %v1565 = vadd.f32 0.0, %v1564
        %v1566 = vpop.f32.mrb[0].mxu0
        %v1567 = vadd.f32 0.0, %v1566
        %v1568 = vpop.f32.mrb[0].mxu0
        %v1569 = vadd.f32 0.0, %v1568
        %1570 = vdwg.mxu0
        %v1571 = vadd.f32 %v1439, %v1553
        %v1572 = vadd.f32 %v1440, %v1555
        %v1573 = vadd.f32 %v1441, %v1557
        %v1574 = vadd.f32 %v1442, %v1559
        %v1575 = vadd.f32 %v1443, %v1563
        %v1576 = vadd.f32 %v1444, %v1565
        %v1577 = vadd.f32 %v1445, %v1567
        %v1578 = vadd.f32 %v1446, %v1569
        %v1579 = vld [vmem:[%s5] sm:$0xff]
        %v1580 = vld [vmem:[%s5 + $0x8] sm:$0xff]
        %v1581 = vld [vmem:[%s5 + $0x10] sm:$0xff]
        %v1582 = vld [vmem:[%s5 + $0x18] sm:$0xff]
        %1584 = vset.pattern.permute.xlu0 0
        %1585 = vperm.xlu0 %1584, %v1579
        %v1586 = vpop.permute.xlu0 %1585
        %1589 = vset.pattern.permute.xlu0 0
        %1590 = vperm.xlu0 %1589, %v1580
        %v1591 = vpop.permute.xlu0 %1590
        %1594 = vset.pattern.permute.xlu0 0
        %1595 = vperm.xlu0 %1594, %v1581
        %v1596 = vpop.permute.xlu0 %1595
        %1599 = vset.pattern.permute.xlu0 0
        %1600 = vperm.xlu0 %1599, %v1582
        %v1601 = vpop.permute.xlu0 %1600
        %v1603 = vadd.f32 %v1571, %v1586
        %v1604 = vadd.f32 %v1572, %v1586
        %v1605 = vadd.f32 %v1573, %v1591
        %v1606 = vadd.f32 %v1574, %v1591
        %v1607 = vadd.f32 %v1575, %v1596
        %v1608 = vadd.f32 %v1576, %v1596
        %v1609 = vadd.f32 %v1577, %v1601
        %v1610 = vadd.f32 %v1578, %v1601
        %v1611 = vmul.f32 %v1603, 0.5
        %v1612 = vmul.f32 %v1604, 0.5
        %v1613 = vmul.f32 %v1605, 0.5
        %v1614 = vmul.f32 %v1606, 0.5
        %v1615 = vmul.f32 %v1603, 0.70710677
        %v1616 = vmul.f32 %v1604, 0.70710677
        %v1617 = vmul.f32 %v1605, 0.70710677
        %v1618 = vmul.f32 %v1606, 0.70710677
        %v1619 = verf.f32.pop %v1615
        %v1620 = verf.f32.pop %v1616
        %v1621 = verf.f32.pop %v1617
        %v1622 = verf.f32.pop %v1618
        %v1623 = vadd.f32 %v1619, 1.0
        %v1624 = vadd.f32 %v1620, 1.0
        %v1625 = vadd.f32 %v1621, 1.0
        %v1626 = vadd.f32 %v1622, 1.0
        %v1627 = vmul.f32 %v1611, %v1623
        %v1628 = vmul.f32 %v1612, %v1624
        %v1629 = vmul.f32 %v1613, %v1625
        %v1630 = vmul.f32 %v1614, %v1626
        %v1631 = vmul.f32 %v1627, %v1607
        %v1632 = vmul.f32 %v1628, %v1608
        %v1633 = vmul.f32 %v1629, %v1609
        %v1634 = vmul.f32 %v1630, %v1610
        %v1635 = vpack.c.bf16 %v1633, %v1631
        %v1636 = vpack.c.bf16 %v1634, %v1632
        %v1637 = vld [vmem:[%s3] sm:$0xf]
        %v1638 = vld [vmem:[%s6] sm:$0xff]
        %1640 = vset.pattern.permute.xlu0 0
        %1641 = vperm.xlu0 %1640, %v1638
        %v1642 = vpop.permute.xlu0 %1641
        %vm1644 = vcmask 130048
        %v1646 = vsel %vm1644, %v1637, 0
        %1648 = vmatprep.subr.bf16.mxu0 %v1636
        %1649 = vmatpush1.bf16.msra.mxu0 %v1635
        %1650 = vmatprep.subr.bf16.mxu0 0
        %1651 = vmatpush1.bf16.msra.mxu0 0
        %1652 = vmatprep.subr.bf16.mxu0 0
        %1653 = vmatpush1.bf16.msra.mxu0 0
        %1654 = vmatprep.subr.bf16.mxu0 0
        %1655 = vmatpush1.bf16.msra.mxu0 0
        %1656 = vmatprep.subr.bf16.mxu0 0
        %1657 = vmatpush1.bf16.msra.mxu0 0
        %1658 = vmatprep.subr.bf16.mxu0 0
        %1659 = vmatpush1.bf16.msra.mxu0 0
        %1660 = vmatprep.subr.bf16.mxu0 0
        %1661 = vmatpush1.bf16.msra.mxu0 0
        %1662 = vmatprep.subr.bf16.mxu0 0
        %1663 = vmatpush1.bf16.msra.mxu0 0
        %1664 = vmatprep.subr.bf16.mxu0 0
        %1665 = vmatpush1.bf16.msra.mxu0 0
        %1666 = vmatprep.subr.bf16.mxu0 0
        %1667 = vmatpush1.bf16.msra.mxu0 0
        %1668 = vmatprep.subr.bf16.mxu0 0
        %1669 = vmatpush1.bf16.msra.mxu0 0
        %1670 = vmatprep.subr.bf16.mxu0 0
        %1671 = vmatpush1.bf16.msra.mxu0 0
        %1672 = vmatprep.subr.bf16.mxu0 0
        %1673 = vmatpush1.bf16.msra.mxu0 0
        %1674 = vmatprep.subr.bf16.mxu0 0
        %1675 = vmatpush1.bf16.msra.mxu0 0
        %1676 = vmatprep.subr.bf16.mxu0 0
        %1677 = vmatpush1.bf16.msra.mxu0 0
        %1678 = vmatprep.subr.bf16.mxu0 0
        %1679 = vmatpush1.bf16.msra.mxu0 0
        %1680 = vmatprep.mubr.bf16.mxu0 0
        %1681 = vmatmul.mubr.bf16.gmra.mrb[0].mxu0 %v1646
        %v1682 = vpop.f32.mrb[0].mxu0
        %v1683 = vadd.f32 %v1642, %v1682
        %v1684 = vpop.f32.mrb[0].mxu0
        %v1685 = vadd.f32 %v1642, %v1684
        %v1686 = vpop.f32.mrb[0].mxu0
        %v1687 = vpop.f32.mrb[0].mxu0
        %1688 = vdwg.mxu0
        %1689 = vst [vmem:[%s313] sm:$0xff] %v1683
        %1690 = vst [vmem:[%s313 + $0x8] sm:$0xff] %v1685
        %s1691 = sand.u32 %s204, 1
        %s1692 = scalar_lea.sflag [#allocation4], %s1691
        %s1693 = sand.u32 %s204, 1
        %s1694 = smul.addr %s1693, 16
        %s1695 = scalar_lea.vmem [#allocation5], %s1694
        // Predicated region
        $region57: #{tpu_custom_call.1} parent=51 // pred_check
          %p1696 = pneg %p214
        $region58: #{tpu_custom_call.1} parent=51 // pred_check_branch
          %1698 = sbr.rel (%p1696) target = $region60
        $region59: #{tpu_custom_call.1} parent=51 // pred_region
          %s1700 = ssub.s32 256, 256
          %1701 = vsyncadd %s1692, %s1700
          %s1702 = smul.addr %s23, 2
          %s1703 = smul.addr %s1702, 128
          %s1704 = scalar_lea.hbm %s8, %s1703
          %s1706 = sshll.u32 %s1695, 4
          %s1707 = int_to_ptr.vmem [resolvable:$true] %s1706
          %1709 = dma.vmem_to_hbm [thread:$0]  %s1707, 256, %s1704, %s1692
        $region60: #{tpu_custom_call.1} parent=51 // pred_fallthru
          _
      $region52: #{tpu_custom_call.1} parent=5 // pred_fallthru
        _
      %p1710 = scmp.le.s32.totalorder 2, %s18
      // Predicated region
      $region61: #{tpu_custom_call.1} parent=5 // pred_check
        %p1711 = pneg %p1710
      $region62: #{tpu_custom_call.1} parent=5 // pred_check_branch
        %1713 = sbr.rel (%p1711) target = $region64
      $region63: #{tpu_custom_call.1} parent=5 // pred_region
        %s1714 = ssub.s32 %s18, 2
        // Predicated region
        $region65: #{tpu_custom_call.1} parent=63 // pred_check
          %p1715 = pneg %p220
        $region66: #{tpu_custom_call.1} parent=63 // pred_check_branch
          %1717 = sbr.rel (%p1715) target = $region68
        $region67: #{tpu_custom_call.1} parent=63 // pred_region
          %s1718 = sand.u32 %s205, 1
          %s1719 = scalar_lea.sflag [#allocation4], %s1718
          %s1720 = sand.u32 %s205, 1
          %s1721 = smul.addr %s1720, 16
          %s1722 = scalar_lea.vmem [#allocation5], %s1721
          %1723 = dma.done %s1719, 256
        $region68: #{tpu_custom_call.1} parent=63 // pred_fallthru
          _
      $region64: #{tpu_custom_call.1} parent=5 // pred_fallthru
        _
    $region6: #{tpu_custom_call.1} parent=1 // loop_footer
      %s22 = sadd.s32 1, %s18
    $region7: #{tpu_custom_call.1} parent=1 // loop_footer_branch
      %17 = sbr.rel target = $region3
    $region8: #{tpu_custom_call.1} parent=1 // loop_exit
      _
    %1724 = vsyncpa [#allocation3], 1
    %s1725 = scalar_lea.sflag [#allocation3], 1
    %1726 = vsyncpa %s1725, 1
    %1727 = vsyncpa [#allocation4], 1
    %s1728 = scalar_lea.sflag [#allocation4], 1
    %1729 = vsyncpa %s1728, 1

</llo_original>
